<compile_context>
chip_gen: v6e
topology: v6e:2x2x1
jax: 0.10.0
libtpu: 0.0.40
codegen_flags: <defaults>
</compile_context>

<pallas_src>
import functools
import math

import jax
import jax.numpy as jnp
from jax import lax
from jax.experimental import pallas as pl
from jax.experimental.pallas import tpu as pltpu

NEG_INF = -1e9
LN_EPS = 1e-5
COMPUTE_DTYPE = jnp.bfloat16          # MXU-native matmul operand dtype
VMEM_LIMIT_BYTES = 64 * 1024 * 1024   # explicit scoped-VMEM limit (fits v5e/v6e/v7x)


def _round_up(x, m):
    return ((x + m - 1) // m) * m


# ----------------------------------------------------------------------------
# In-kernel helpers (traced inside the fused stack kernels)
# ----------------------------------------------------------------------------
def _add_layer_norm(x, res, gamma, beta):
    """LayerNorm(x + res) * gamma + beta  (biased variance, eps=1e-5), f32."""
    h = x + res
    mu = jnp.mean(h, axis=-1, keepdims=True)
    var = jnp.mean(jnp.square(h - mu), axis=-1, keepdims=True)
    return (h - mu) * lax.rsqrt(var + LN_EPS) * gamma + beta


def _mha(q, k, v, wo, mask_add, n_heads, d_k, d_v):
    """Multi-head attention fused with the output projection.

    q: (Sq, H*dk) f32, ALREADY scaled by 1/sqrt(d_k).
    k: (Sk, H*dk) f32,  v: (Sk, H*dv) f32,  wo: (H*dv, D) bf16.
    mask_add: additive f32 mask, (1, Sk) or (Sq, Sk).
    Returns (Sq, D) f32 == concat_h(softmax(q_h k_h^T + mask) v_h) @ wo.

    Each head accumulates directly into the out-projection result (no
    jnp.concatenate, no per-head score-matrix scaling). Heads are a small
    static loop; K stays row-major (dot_general contracts the last dims).
    """
    sq = q.shape[0]
    d_model = wo.shape[1]
    qb = q.astype(COMPUTE_DTYPE)
    kb = k.astype(COMPUTE_DTYPE)
    vb = v.astype(COMPUTE_DTYPE)
    out = jnp.zeros((sq, d_model), jnp.float32)
    for h in range(n_heads):
        qh = qb[:, h * d_k:(h + 1) * d_k]
        kh = kb[:, h * d_k:(h + 1) * d_k]
        vh = vb[:, h * d_v:(h + 1) * d_v]
        s = lax.dot_general(qh, kh, (((1,), (1,)), ((), ())),
                            preferred_element_type=jnp.float32)
        s = s + mask_add
        s = s - jnp.max(s, axis=-1, keepdims=True)
        p = jnp.exp(s)
        # Approximate reciprocal rides the EUP slot; ~1e-4 rel. error vs exact.
        p = p * pl.reciprocal(jnp.sum(p, axis=-1, keepdims=True), approx=True)
        ctx = jnp.dot(p.astype(COMPUTE_DTYPE), vh,
                      preferred_element_type=jnp.float32)
        out = out + jnp.dot(ctx.astype(COMPUTE_DTYPE),
                            wo[h * d_v:(h + 1) * d_v, :],
                            preferred_element_type=jnp.float32)
    return out


# ----------------------------------------------------------------------------
# Encoder stack kernel: grid = (batch, layer); residual stream stays resident
# in the revisited output block across the layer axis.
# ----------------------------------------------------------------------------
def _encoder_stack_kernel(x_ref, mask_ref,
                          wqkv_ref, bqkv_ref, wo_ref, bo_ref,
                          ln1_g_ref, ln1_b_ref,
                          w1_ref, b1_ref, w2_ref, b2_ref,
                          ln2_g_ref, ln2_b_ref,
                          o_ref, *, n_heads, d_k, d_v):
    layer = pl.program_id(1)
    hk = n_heads * d_k
    scale = 1.0 / math.sqrt(d_k)

    @pl.when(layer == 0)
    def _():
        o_ref[0] = x_ref[0]          # seed residual stream with the embedding

    x = o_ref[0]                      # (S, D) f32, previous layer's output
    xb = x.astype(COMPUTE_DTYPE)

    # Fused QKV projection (one bf16 matmul), scale folded into Q once.
    qkv = jnp.dot(xb, wqkv_ref[0], preferred_element_type=jnp.float32) + bqkv_ref[0]
    q = qkv[:, :hk] * scale
    k = qkv[:, hk:2 * hk]
    v = qkv[:, 2 * hk:]

    attn = _mha(q, k, v, wo_ref[0], mask_ref[0], n_heads, d_k, d_v) + bo_ref[0]
    h1 = _add_layer_norm(x, attn, ln1_g_ref[0], ln1_b_ref[0])

    ff = jnp.dot(h1.astype(COMPUTE_DTYPE), w1_ref[0],
                 preferred_element_type=jnp.float32) + b1_ref[0]
    ff = jnp.maximum(ff, 0.0)
    ff = jnp.dot(ff.astype(COMPUTE_DTYPE), w2_ref[0],
                 preferred_element_type=jnp.float32) + b2_ref[0]

    o_ref[0] = _add_layer_norm(h1, ff, ln2_g_ref[0], ln2_b_ref[0])


def encoder_stack(x, key_mask_row, p, n_heads, d_k, d_v):
    B, S, D = x.shape
    L = p["wqkv"].shape[0]
    F = p["w1"].shape[2]
    hk = n_heads * d_k
    hv = n_heads * d_v
    C = 2 * hk + hv

    def bspec(shape):   # per-batch block, constant across layers (stays resident)
        return pl.BlockSpec(shape, lambda b, l: (b,) + (0,) * (len(shape) - 1))

    def lspec(shape):   # per-layer weight block, streamed along the layer axis
        return pl.BlockSpec(shape, lambda b, l: (l,) + (0,) * (len(shape) - 1))

    kern = functools.partial(_encoder_stack_kernel,
                             n_heads=n_heads, d_k=d_k, d_v=d_v)
    return pl.pallas_call(
        kern,
        grid=(B, L),
        in_specs=[
            bspec((1, S, D)),
            bspec((1, 1, S)),
            lspec((1, D, C)), lspec((1, 1, C)),
            lspec((1, hv, D)), lspec((1, 1, D)),
            lspec((1, 1, D)), lspec((1, 1, D)),
            lspec((1, D, F)), lspec((1, 1, F)),
            lspec((1, F, D)), lspec((1, 1, D)),
            lspec((1, 1, D)), lspec((1, 1, D)),
        ],
        out_specs=pl.BlockSpec((1, S, D), lambda b, l: (b, 0, 0)),
        out_shape=jax.ShapeDtypeStruct((B, S, D), jnp.float32),
        compiler_params=pltpu.CompilerParams(
            dimension_semantics=("parallel", "arbitrary"),
            vmem_limit_bytes=VMEM_LIMIT_BYTES),
    )(x, key_mask_row,
      p["wqkv"], p["bqkv"], p["wo"], p["bo"],
      p["ln1_g"], p["ln1_b"],
      p["w1"], p["b1"], p["w2"], p["b2"],
      p["ln2_g"], p["ln2_b"])


# ----------------------------------------------------------------------------
# Decoder stack kernel: causal self-MHA -> Add&LN -> cross-MHA -> Add&LN ->
# FFN -> Add&LN, grid = (batch, layer).
# ----------------------------------------------------------------------------
def _decoder_stack_kernel(y_ref, enc_ref, smask_ref, cmask_ref, causal_ref,
                          s_wqkv_ref, s_bqkv_ref, s_wo_ref, s_bo_ref,
                          ln1_g_ref, ln1_b_ref,
                          c_wq_ref, c_bq_ref, c_wkv_ref, c_bkv_ref,
                          c_wo_ref, c_bo_ref,
                          ln2_g_ref, ln2_b_ref,
                          w1_ref, b1_ref, w2_ref, b2_ref,
                          ln3_g_ref, ln3_b_ref,
                          o_ref, *, n_heads, d_k, d_v):
    layer = pl.program_id(1)
    hk = n_heads * d_k
    scale = 1.0 / math.sqrt(d_k)

    @pl.when(layer == 0)
    def _():
        o_ref[0] = y_ref[0]           # seed residual stream with the embedding

    y = o_ref[0]                       # (Sd, D) f32
    enc = enc_ref[0]                   # (Se, D) f32

    # --- causal self-attention (key-padding row + shared causal block) ---
    qkv = jnp.dot(y.astype(COMPUTE_DTYPE), s_wqkv_ref[0],
                  preferred_element_type=jnp.float32) + s_bqkv_ref[0]
    q = qkv[:, :hk] * scale
    k = qkv[:, hk:2 * hk]
    v = qkv[:, 2 * hk:]
    self_mask = smask_ref[0] + causal_ref[...]          # (Sd, Sd) via broadcast
    sa = _mha(q, k, v, s_wo_ref[0], self_mask, n_heads, d_k, d_v) + s_bo_ref[0]
    h1 = _add_layer_norm(y, sa, ln1_g_ref[0], ln1_b_ref[0])

    # --- cross attention: Q from decoder stream, K/V from encoder output ---
    qc = (jnp.dot(h1.astype(COMPUTE_DTYPE), c_wq_ref[0],
                  preferred_element_type=jnp.float32) + c_bq_ref[0]) * scale
    kvc = jnp.dot(enc.astype(COMPUTE_DTYPE), c_wkv_ref[0],
                  preferred_element_type=jnp.float32) + c_bkv_ref[0]
    kc = kvc[:, :hk]
    vc = kvc[:, hk:]
    ca = _mha(qc, kc, vc, c_wo_ref[0], cmask_ref[0], n_heads, d_k, d_v) + c_bo_ref[0]
    h2 = _add_layer_norm(h1, ca, ln2_g_ref[0], ln2_b_ref[0])

    # --- FFN ---
    ff = jnp.dot(h2.astype(COMPUTE_DTYPE), w1_ref[0],
                 preferred_element_type=jnp.float32) + b1_ref[0]
    ff = jnp.maximum(ff, 0.0)
    ff = jnp.dot(ff.astype(COMPUTE_DTYPE), w2_ref[0],
                 preferred_element_type=jnp.float32) + b2_ref[0]

    o_ref[0] = _add_layer_norm(h2, ff, ln3_g_ref[0], ln3_b_ref[0])


def decoder_stack(y, enc_out, dec_key_mask, enc_key_mask, causal, p,
                  n_heads, d_k, d_v):
    B, Sd, D = y.shape
    Se = enc_out.shape[1]
    L = p["s_wqkv"].shape[0]
    F = p["w1"].shape[2]
    hk = n_heads * d_k
    hv = n_heads * d_v
    C = 2 * hk + hv

    def bspec(shape):
        return pl.BlockSpec(shape, lambda b, l: (b,) + (0,) * (len(shape) - 1))

    def cspec(shape):
        return pl.BlockSpec(shape, lambda b, l: (0,) * len(shape))

    def lspec(shape):
        return pl.BlockSpec(shape, lambda b, l: (l,) + (0,) * (len(shape) - 1))

    kern = functools.partial(_decoder_stack_kernel,
                             n_heads=n_heads, d_k=d_k, d_v=d_v)
    return pl.pallas_call(
        kern,
        grid=(B, L),
        in_specs=[
            bspec((1, Sd, D)),
            bspec((1, Se, D)),
            bspec((1, 1, Sd)),
            bspec((1, 1, Se)),
            cspec((Sd, Sd)),
            lspec((1, D, C)), lspec((1, 1, C)),
            lspec((1, hv, D)), lspec((1, 1, D)),
            lspec((1, 1, D)), lspec((1, 1, D)),
            lspec((1, D, hk)), lspec((1, 1, hk)),
            lspec((1, D, hk + hv)), lspec((1, 1, hk + hv)),
            lspec((1, hv, D)), lspec((1, 1, D)),
            lspec((1, 1, D)), lspec((1, 1, D)),
            lspec((1, D, F)), lspec((1, 1, F)),
            lspec((1, F, D)), lspec((1, 1, D)),
            lspec((1, 1, D)), lspec((1, 1, D)),
        ],
        out_specs=pl.BlockSpec((1, Sd, D), lambda b, l: (b, 0, 0)),
        out_shape=jax.ShapeDtypeStruct((B, Sd, D), jnp.float32),
        compiler_params=pltpu.CompilerParams(
            dimension_semantics=("parallel", "arbitrary"),
            vmem_limit_bytes=VMEM_LIMIT_BYTES),
    )(y, enc_out, dec_key_mask, enc_key_mask, causal,
      p["s_wqkv"], p["s_bqkv"], p["s_wo"], p["s_bo"],
      p["ln1_g"], p["ln1_b"],
      p["c_wq"], p["c_bq"], p["c_wkv"], p["c_bkv"],
      p["c_wo"], p["c_bo"],
      p["ln2_g"], p["ln2_b"],
      p["w1"], p["b1"], p["w2"], p["b2"],
      p["ln3_g"], p["ln3_b"])


# ----------------------------------------------------------------------------
# Tied output projection: logits = y @ emb.T (no bias, no materialized emb.T).
# Rows / vocab padded to lane-aligned tiles; both grid axes "parallel".
# ----------------------------------------------------------------------------
def _tied_logits_kernel(y_ref, emb_ref, o_ref):
    o_ref[...] = lax.dot_general(
        y_ref[...], emb_ref[...], (((1,), (1,)), ((), ())),
        preferred_element_type=jnp.float32)


def tied_output_projection(y, emb):
    M, D = y.shape
    V = emb.shape[0]
    yb = y.astype(COMPUTE_DTYPE)
    eb = emb.astype(COMPUTE_DTYPE)

    tm = 256 if M >= 256 else _round_up(M, 16)     # sublane-aligned rows
    tn = 512 if V >= 512 else _round_up(V, 128)    # lane-dense vocab tiles
    Mp = _round_up(M, tm)
    Vp = _round_up(V, tn)
    if Mp != M:
        yb = jnp.pad(yb, ((0, Mp - M), (0, 0)))
    if Vp != V:
        eb = jnp.pad(eb, ((0, Vp - V), (0, 0)))

    out = pl.pallas_call(
        _tied_logits_kernel,
        grid=(Mp // tm, Vp // tn),
        in_specs=[
            pl.BlockSpec((tm, D), lambda i, j: (i, 0)),
            pl.BlockSpec((tn, D), lambda i, j: (j, 0)),
        ],
        out_specs=pl.BlockSpec((tm, tn), lambda i, j: (i, j)),
        out_shape=jax.ShapeDtypeStruct((Mp, Vp), jnp.float32),
        compiler_params=pltpu.CompilerParams(
            dimension_semantics=("parallel", "parallel"),
            vmem_limit_bytes=VMEM_LIMIT_BYTES),
    )(yb, eb)
    return out[:M, :V]


# ----------------------------------------------------------------------------
# Model glue (plain JAX): parameter init, embedding lookup, mask building.
# ----------------------------------------------------------------------------
def sinusoidal_positional_encoding(max_length, d_model):
    pos = jnp.arange(max_length, dtype=jnp.float32)[:, None]
    i = jnp.arange(d_model // 2, dtype=jnp.float32)[None, :]
    angle = pos / jnp.power(10000.0, 2.0 * i / d_model)
    pe = jnp.zeros((max_length, d_model), jnp.float32)
    pe = pe.at[:, 0::2].set(jnp.sin(angle))
    pe = pe.at[:, 1::2].set(jnp.cos(angle))
    return pe


def init_transformer_params(key, vocab_size, hp, max_length):
    D, dk, dv = hp["d_model"], hp["d_k"], hp["d_v"]
    H, F, L = hp["n_heads"], hp["d_ff"], hp["n"]
    hk, hv = H * dk, H * dv
    C = 2 * hk + hv

    keys = jax.random.split(key, 12)

    def w(k, shape, scale=0.02):
        # Weights stored in bf16 (halves DMA bytes / VMEM); biases & LN in f32.
        return (scale * jax.random.normal(k, shape, jnp.float32)).astype(COMPUTE_DTYPE)

    def zeros(shape):
        return jnp.zeros(shape, jnp.float32)

    def ones(shape):
        return jnp.ones(shape, jnp.float32)

    encoder = dict(
        wqkv=w(keys[1], (L, D, C)), bqkv=zeros((L, 1, C)),
        wo=w(keys[2], (L, hv, D)), bo=zeros((L, 1, D)),
        ln1_g=ones((L, 1, D)), ln1_b=zeros((L, 1, D)),
        w1=w(keys[3], (L, D, F)), b1=zeros((L, 1, F)),
        w2=w(keys[4], (L, F, D)), b2=zeros((L, 1, D)),
        ln2_g=ones((L, 1, D)), ln2_b=zeros((L, 1, D)),
    )
    decoder = dict(
        s_wqkv=w(keys[5], (L, D, C)), s_bqkv=zeros((L, 1, C)),
        s_wo=w(keys[6], (L, hv, D)), s_bo=zeros((L, 1, D)),
        ln1_g=ones((L, 1, D)), ln1_b=zeros((L, 1, D)),
        c_wq=w(keys[7], (L, D, hk)), c_bq=zeros((L, 1, hk)),
        c_wkv=w(keys[8], (L, D, hk + hv)), c_bkv=zeros((L, 1, hk + hv)),
        c_wo=w(keys[9], (L, hv, D)), c_bo=zeros((L, 1, D)),
        ln2_g=ones((L, 1, D)), ln2_b=zeros((L, 1, D)),
        w1=w(keys[10], (L, D, F)), b1=zeros((L, 1, F)),
        w2=w(keys[11], (L, F, D)), b2=zeros((L, 1, D)),
        ln3_g=ones((L, 1, D)), ln3_b=zeros((L, 1, D)),
    )
    return dict(
        emb=0.1 * jax.random.normal(keys[0], (vocab_size, D), jnp.float32),
        pos=sinusoidal_positional_encoding(max_length, D),
        encoder=encoder,
        decoder=decoder,
    )


def _key_padding_mask_row(mask, B, Sk):
    """(B, 1, Sk) additive f32 key-padding mask (0 keep / -1e9 drop).

    Accepts None, a (B, Sk) key-padding mask, or a (B, Sq, Sk) padding mask
    (first query row taken).  Only O(B*Sk) bytes are DMA'd per layer instead
    of a dense O(B*Sq*Sk) mask.
    """
    if mask is None:
        return jnp.zeros((B, 1, Sk), jnp.float32)
    mask = jnp.asarray(mask)
    if mask.ndim == 3:
        # TODO(synk): assumes padding-style masks (all query rows share the key mask).
        mask = mask[:, 0, :]
    keep = mask.astype(bool)
    return jnp.where(keep, 0.0, NEG_INF).astype(jnp.float32)[:, None, :]


def _causal_additive(Sd):
    r = jnp.arange(Sd)
    return jnp.where(r[:, None] >= r[None, :], 0.0, NEG_INF).astype(jnp.float32)


def transformer_forward(params, hp, encoder_inputs, decoder_inputs,
                        encoder_mask=None, decoder_mask=None):
    d_model, d_k, d_v = hp["d_model"], hp["d_k"], hp["d_v"]
    n_heads = hp["n_heads"]
    B, Se = encoder_inputs.shape
    Sd = decoder_inputs.shape[1]
    V = params["emb"].shape[0]

    # Embedding (token-id gather stays in plain JAX; dropout is identity in eval).
    # TODO(synk): token-id gather has no clean tiled-Pallas equivalent at this size.
    enc_x = jnp.take(params["emb"], encoder_inputs, axis=0) + params["pos"][:Se][None]
    dec_x = jnp.take(params["emb"], decoder_inputs, axis=0) + params["pos"][:Sd][None]

    enc_key_mask = _key_padding_mask_row(encoder_mask, B, Se)
    dec_key_mask = _key_padding_mask_row(decoder_mask, B, Sd)
    causal = _causal_additive(Sd)

    # Whole encoder / decoder stacks as single pallas_calls (grid = batch x layer).
    # TODO(synk): for very long sequences on v7x (64 MiB VMEM), add query-row
    # (flash-style) tiling of the attention blocks as an extra grid axis.
    enc_out = encoder_stack(enc_x, enc_key_mask, params["encoder"],
                            n_heads, d_k, d_v)
    dec_out = decoder_stack(dec_x, enc_out, dec_key_mask, enc_key_mask, causal,
                            params["decoder"], n_heads, d_k, d_v)

    # Output layer with weight tying: logits = y @ emb^T (no bias, no emb.T copy).
    logits = tied_output_projection(dec_out.reshape(B * Sd, d_model), params["emb"])
    return logits.reshape(B, Sd, V)


# ----------------------------------------------------------------------------
# Demo
# ----------------------------------------------------------------------------
if __name__ == "__main__":
    hparams = {"d_model": 32, "d_k": 8, "d_v": 8, "n_heads": 4,
               "d_ff": 64, "n": 2, "dropout": 0.1}
    vocab_size = 50
    max_length = 64
    batch, seq_enc, seq_dec = 2, 8, 8

    key = jax.random.PRNGKey(0)
    k_params, k_enc, k_dec = jax.random.split(key, 3)
    params = init_transformer_params(k_params, vocab_size, hparams, max_length)

    encoder_inputs = jax.random.randint(k_enc, (batch, seq_enc), 0, vocab_size,
                                        dtype=jnp.int32)
    decoder_inputs = jax.random.randint(k_dec, (batch, seq_dec), 0, vocab_size,
                                        dtype=jnp.int32)

    logits = transformer_forward(params, hparams, encoder_inputs, decoder_inputs,
                                 encoder_mask=None, decoder_mask=None)
    logits = jax.block_until_ready(logits)
    assert logits.shape == (batch, seq_dec, vocab_size)
    assert bool(jnp.all(jnp.isfinite(logits)))
    print("KERNEL_OK")
</pallas_src>

<mosaic_0001>
module attributes {stable_mosaic.version = 11 : i64} {
  func.func @_encoder_stack_kernel(%arg0: i32, %arg1: i32, %arg2: memref<1x8x32xf32, #tpu.memory_space<vmem>>, %arg3: memref<1x1x8xf32, #tpu.memory_space<vmem>>, %arg4: memref<1x32x96xbf16, #tpu.memory_space<vmem>>, %arg5: memref<1x1x96xf32, #tpu.memory_space<vmem>>, %arg6: memref<1x32x32xbf16, #tpu.memory_space<vmem>>, %arg7: memref<1x1x32xf32, #tpu.memory_space<vmem>>, %arg8: memref<1x1x32xf32, #tpu.memory_space<vmem>>, %arg9: memref<1x1x32xf32, #tpu.memory_space<vmem>>, %arg10: memref<1x32x64xbf16, #tpu.memory_space<vmem>>, %arg11: memref<1x1x64xf32, #tpu.memory_space<vmem>>, %arg12: memref<1x64x32xbf16, #tpu.memory_space<vmem>>, %arg13: memref<1x1x32xf32, #tpu.memory_space<vmem>>, %arg14: memref<1x1x32xf32, #tpu.memory_space<vmem>>, %arg15: memref<1x1x32xf32, #tpu.memory_space<vmem>>, %arg16: memref<1x8x32xf32, #tpu.memory_space<vmem>>) attributes {dimension_semantics = [#tpu.dimension_semantics<parallel>, #tpu.dimension_semantics<arbitrary>], iteration_bounds = array<i64: 2, 2>, scalar_prefetch = 0 : i64, scratch_operands = 0 : i64, tpu.core_type = #tpu.core_type<tc>, window_params = [{transform_indices = @transform_0, window_bounds = array<i64: 1, 8, 32>}, {transform_indices = @transform_1, window_bounds = array<i64: 1, 1, 8>}, {transform_indices = @transform_2, window_bounds = array<i64: 1, 32, 96>}, {transform_indices = @transform_3, window_bounds = array<i64: 1, 1, 96>}, {transform_indices = @transform_4, window_bounds = array<i64: 1, 32, 32>}, {transform_indices = @transform_5, window_bounds = array<i64: 1, 1, 32>}, {transform_indices = @transform_6, window_bounds = array<i64: 1, 1, 32>}, {transform_indices = @transform_7, window_bounds = array<i64: 1, 1, 32>}, {transform_indices = @transform_8, window_bounds = array<i64: 1, 32, 64>}, {transform_indices = @transform_9, window_bounds = array<i64: 1, 1, 64>}, {transform_indices = @transform_10, window_bounds = array<i64: 1, 64, 32>}, {transform_indices = @transform_11, window_bounds = array<i64: 1, 1, 32>}, {transform_indices = @transform_12, window_bounds = array<i64: 1, 1, 32>}, {transform_indices = @transform_13, window_bounds = array<i64: 1, 1, 32>}, {transform_indices = @transform_14, window_bounds = array<i64: 1, 8, 32>}]} {
    %c0_i32 = arith.constant 0 : i32
    %0 = arith.cmpi eq, %arg1, %c0_i32 : i32
    %1 = arith.extui %0 : i1 to i32
    %c0_i32_0 = arith.constant 0 : i32
    %2 = arith.cmpi ne, %1, %c0_i32_0 : i32
    scf.if %2 {
      %c0_80 = arith.constant 0 : index
      %c0_81 = arith.constant 0 : index
      %c0_82 = arith.constant 0 : index
      %193 = vector.load %arg2[%c0_80, %c0_81, %c0_82] : memref<1x8x32xf32, #tpu.memory_space<vmem>>, vector<1x8x32xf32>
      %194 = vector.shape_cast %193 : vector<1x8x32xf32> to vector<8x32xf32>
      %c0_83 = arith.constant 0 : index
      %c0_84 = arith.constant 0 : index
      %c0_85 = arith.constant 0 : index
      %195 = vector.load %arg16[%c0_83, %c0_84, %c0_85] : memref<1x8x32xf32, #tpu.memory_space<vmem>>, vector<1x8x32xf32>
      %196 = vector.shape_cast %195 : vector<1x8x32xf32> to vector<8x32xf32>
      %197 = vector.shape_cast %194 : vector<8x32xf32> to vector<1x8x32xf32>
      tpu.vector_store %arg16[%c0_83, %c0_84, %c0_85], %197 {strides = array<i32>} : memref<1x8x32xf32, #tpu.memory_space<vmem>>, vector<1x8x32xf32>,
    } else {
    }
    %c0 = arith.constant 0 : index
    %c0_1 = arith.constant 0 : index
    %c0_2 = arith.constant 0 : index
    %3 = vector.load %arg16[%c0, %c0_1, %c0_2] : memref<1x8x32xf32, #tpu.memory_space<vmem>>, vector<1x8x32xf32>
    %4 = vector.shape_cast %3 : vector<1x8x32xf32> to vector<8x32xf32>
    %5 = arith.truncf %4 : vector<8x32xf32> to vector<8x32xbf16>
    %c0_3 = arith.constant 0 : index
    %c0_4 = arith.constant 0 : index
    %c0_5 = arith.constant 0 : index
    %6 = vector.load %arg4[%c0_3, %c0_4, %c0_5] : memref<1x32x96xbf16, #tpu.memory_space<vmem>>, vector<1x32x96xbf16>
    %7 = vector.shape_cast %6 : vector<1x32x96xbf16> to vector<32x96xbf16>
    %cst = arith.constant dense<0.000000e+00> : vector<8x96xf32>
    %8 = tpu.matmul %5, %7, %cst {dimension_numbers = #tpu.dot_dimension_numbers<[1], [0], [0], [1], [0, 0, 1, 1], [], []>} : vector<8x32xbf16>, vector<32x96xbf16>, vector<8x96xf32> -> vector<8x96xf32>
    %c0_6 = arith.constant 0 : index
    %c0_7 = arith.constant 0 : index
    %c0_8 = arith.constant 0 : index
    %9 = vector.load %arg5[%c0_6, %c0_7, %c0_8] : memref<1x1x96xf32, #tpu.memory_space<vmem>>, vector<1x1x96xf32>
    %10 = vector.shape_cast %9 : vector<1x1x96xf32> to vector<1x96xf32>
    %11 = vector.broadcast %10 : vector<1x96xf32> to vector<8x96xf32>
    %12 = arith.addf %8, %11 : vector<8x96xf32>
    %13 = vector.extract_strided_slice %12 {offsets = [0, 0], sizes = [8, 32], strides = [1, 1]} : vector<8x96xf32> to vector<8x32xf32>
    %cst_9 = arith.constant 0.353553385 : f32
    %14 = vector.broadcast %cst_9 : f32 to vector<8x32xf32>
    %15 = arith.mulf %13, %14 : vector<8x32xf32>
    %16 = vector.extract_strided_slice %12 {offsets = [0, 32], sizes = [8, 32], strides = [1, 1]} : vector<8x96xf32> to vector<8x32xf32>
    %17 = vector.extract_strided_slice %12 {offsets = [0, 64], sizes = [8, 32], strides = [1, 1]} : vector<8x96xf32> to vector<8x32xf32>
    %c0_10 = arith.constant 0 : index
    %c0_11 = arith.constant 0 : index
    %c0_12 = arith.constant 0 : index
    %18 = vector.load %arg6[%c0_10, %c0_11, %c0_12] : memref<1x32x32xbf16, #tpu.memory_space<vmem>>, vector<1x32x32xbf16>
    %19 = vector.shape_cast %18 : vector<1x32x32xbf16> to vector<32x32xbf16>
    %c0_13 = arith.constant 0 : index
    %c0_14 = arith.constant 0 : index
    %c0_15 = arith.constant 0 : index
    %20 = vector.load %arg3[%c0_13, %c0_14, %c0_15] : memref<1x1x8xf32, #tpu.memory_space<vmem>>, vector<1x1x8xf32>
    %21 = vector.shape_cast %20 : vector<1x1x8xf32> to vector<1x8xf32>
    %22 = arith.truncf %15 : vector<8x32xf32> to vector<8x32xbf16>
    %23 = arith.truncf %16 : vector<8x32xf32> to vector<8x32xbf16>
    %24 = arith.truncf %17 : vector<8x32xf32> to vector<8x32xbf16>
    %cst_16 = arith.constant 0.000000e+00 : f32
    %25 = vector.broadcast %cst_16 : f32 to vector<8x32xf32>
    %26 = vector.extract_strided_slice %22 {offsets = [0, 0], sizes = [8, 8], strides = [1, 1]} : vector<8x32xbf16> to vector<8x8xbf16>
    %27 = vector.extract_strided_slice %23 {offsets = [0, 0], sizes = [8, 8], strides = [1, 1]} : vector<8x32xbf16> to vector<8x8xbf16>
    %28 = vector.extract_strided_slice %24 {offsets = [0, 0], sizes = [8, 8], strides = [1, 1]} : vector<8x32xbf16> to vector<8x8xbf16>
    %cst_17 = arith.constant dense<0.000000e+00> : vector<8x8xf32>
    %29 = tpu.matmul %26, %27, %cst_17 {dimension_numbers = #tpu.dot_dimension_numbers<[1], [1], [0], [0], [0, 0, 1, 0], [], []>} : vector<8x8xbf16>, vector<8x8xbf16>, vector<8x8xf32> -> vector<8x8xf32>
    %30 = vector.broadcast %21 : vector<1x8xf32> to vector<8x8xf32>
    %31 = arith.addf %29, %30 : vector<8x8xf32>
    %cst_18 = arith.constant dense<0xFF800000> : vector<8xf32>
    %32 = vector.multi_reduction <maximumf>, %31, %cst_18 [1] : vector<8x8xf32> to vector<8xf32>
    %33 = vector.shape_cast %32 : vector<8xf32> to vector<8x1xf32>
    %34 = vector.broadcast %33 : vector<8x1xf32> to vector<8x8xf32>
    %35 = arith.subf %31, %34 : vector<8x8xf32>
    %36 = math.exp %35 : vector<8x8xf32>
    %cst_19 = arith.constant dense<0.000000e+00> : vector<8xf32>
    %37 = vector.multi_reduction <add>, %36, %cst_19 [1] : vector<8x8xf32> to vector<8xf32>
    %38 = vector.shape_cast %37 : vector<8xf32> to vector<8x1xf32>
    %39 = tpu.reciprocal %38 {approx = true} : vector<8x1xf32> -> vector<8x1xf32>
    %40 = vector.broadcast %39 : vector<8x1xf32> to vector<8x8xf32>
    %41 = arith.mulf %36, %40 : vector<8x8xf32>
    %42 = arith.truncf %41 : vector<8x8xf32> to vector<8x8xbf16>
    %cst_20 = arith.constant dense<0.000000e+00> : vector<8x8xf32>
    %43 = tpu.matmul %42, %28, %cst_20 {dimension_numbers = #tpu.dot_dimension_numbers<[1], [0], [0], [1], [0, 0, 1, 1], [], []>} : vector<8x8xbf16>, vector<8x8xbf16>, vector<8x8xf32> -> vector<8x8xf32>
    %44 = arith.truncf %43 : vector<8x8xf32> to vector<8x8xbf16>
    %45 = vector.extract_strided_slice %19 {offsets = [0, 0], sizes = [8, 32], strides = [1, 1]} : vector<32x32xbf16> to vector<8x32xbf16>
    %cst_21 = arith.constant dense<0.000000e+00> : vector<8x32xf32>
    %46 = tpu.matmul %44, %45, %cst_21 {dimension_numbers = #tpu.dot_dimension_numbers<[1], [0], [0], [1], [0, 0, 1, 1], [], []>} : vector<8x8xbf16>, vector<8x32xbf16>, vector<8x32xf32> -> vector<8x32xf32>
    %47 = arith.addf %25, %46 : vector<8x32xf32>
    %48 = vector.extract_strided_slice %22 {offsets = [0, 8], sizes = [8, 8], strides = [1, 1]} : vector<8x32xbf16> to vector<8x8xbf16>
    %49 = vector.extract_strided_slice %23 {offsets = [0, 8], sizes = [8, 8], strides = [1, 1]} : vector<8x32xbf16> to vector<8x8xbf16>
    %50 = vector.extract_strided_slice %24 {offsets = [0, 8], sizes = [8, 8], strides = [1, 1]} : vector<8x32xbf16> to vector<8x8xbf16>
    %cst_22 = arith.constant dense<0.000000e+00> : vector<8x8xf32>
    %51 = tpu.matmul %48, %49, %cst_22 {dimension_numbers = #tpu.dot_dimension_numbers<[1], [1], [0], [0], [0, 0, 1, 0], [], []>} : vector<8x8xbf16>, vector<8x8xbf16>, vector<8x8xf32> -> vector<8x8xf32>
    %52 = vector.broadcast %21 : vector<1x8xf32> to vector<8x8xf32>
    %53 = arith.addf %51, %52 : vector<8x8xf32>
    %cst_23 = arith.constant dense<0xFF800000> : vector<8xf32>
    %54 = vector.multi_reduction <maximumf>, %53, %cst_23 [1] : vector<8x8xf32> to vector<8xf32>
    %55 = vector.shape_cast %54 : vector<8xf32> to vector<8x1xf32>
    %56 = vector.broadcast %55 : vector<8x1xf32> to vector<8x8xf32>
    %57 = arith.subf %53, %56 : vector<8x8xf32>
    %58 = math.exp %57 : vector<8x8xf32>
    %cst_24 = arith.constant dense<0.000000e+00> : vector<8xf32>
    %59 = vector.multi_reduction <add>, %58, %cst_24 [1] : vector<8x8xf32> to vector<8xf32>
    %60 = vector.shape_cast %59 : vector<8xf32> to vector<8x1xf32>
    %61 = tpu.reciprocal %60 {approx = true} : vector<8x1xf32> -> vector<8x1xf32>
    %62 = vector.broadcast %61 : vector<8x1xf32> to vector<8x8xf32>
    %63 = arith.mulf %58, %62 : vector<8x8xf32>
    %64 = arith.truncf %63 : vector<8x8xf32> to vector<8x8xbf16>
    %cst_25 = arith.constant dense<0.000000e+00> : vector<8x8xf32>
    %65 = tpu.matmul %64, %50, %cst_25 {dimension_numbers = #tpu.dot_dimension_numbers<[1], [0], [0], [1], [0, 0, 1, 1], [], []>} : vector<8x8xbf16>, vector<8x8xbf16>, vector<8x8xf32> -> vector<8x8xf32>
    %66 = arith.truncf %65 : vector<8x8xf32> to vector<8x8xbf16>
    %67 = vector.extract_strided_slice %19 {offsets = [8, 0], sizes = [8, 32], strides = [1, 1]} : vector<32x32xbf16> to vector<8x32xbf16>
    %cst_26 = arith.constant dense<0.000000e+00> : vector<8x32xf32>
    %68 = tpu.matmul %66, %67, %cst_26 {dimension_numbers = #tpu.dot_dimension_numbers<[1], [0], [0], [1], [0, 0, 1, 1], [], []>} : vector<8x8xbf16>, vector<8x32xbf16>, vector<8x32xf32> -> vector<8x32xf32>
    %69 = arith.addf %47, %68 : vector<8x32xf32>
    %70 = vector.extract_strided_slice %22 {offsets = [0, 16], sizes = [8, 8], strides = [1, 1]} : vector<8x32xbf16> to vector<8x8xbf16>
    %71 = vector.extract_strided_slice %23 {offsets = [0, 16], sizes = [8, 8], strides = [1, 1]} : vector<8x32xbf16> to vector<8x8xbf16>
    %72 = vector.extract_strided_slice %24 {offsets = [0, 16], sizes = [8, 8], strides = [1, 1]} : vector<8x32xbf16> to vector<8x8xbf16>
    %cst_27 = arith.constant dense<0.000000e+00> : vector<8x8xf32>
    %73 = tpu.matmul %70, %71, %cst_27 {dimension_numbers = #tpu.dot_dimension_numbers<[1], [1], [0], [0], [0, 0, 1, 0], [], []>} : vector<8x8xbf16>, vector<8x8xbf16>, vector<8x8xf32> -> vector<8x8xf32>
    %74 = vector.broadcast %21 : vector<1x8xf32> to vector<8x8xf32>
    %75 = arith.addf %73, %74 : vector<8x8xf32>
    %cst_28 = arith.constant dense<0xFF800000> : vector<8xf32>
    %76 = vector.multi_reduction <maximumf>, %75, %cst_28 [1] : vector<8x8xf32> to vector<8xf32>
    %77 = vector.shape_cast %76 : vector<8xf32> to vector<8x1xf32>
    %78 = vector.broadcast %77 : vector<8x1xf32> to vector<8x8xf32>
    %79 = arith.subf %75, %78 : vector<8x8xf32>
    %80 = math.exp %79 : vector<8x8xf32>
    %cst_29 = arith.constant dense<0.000000e+00> : vector<8xf32>
    %81 = vector.multi_reduction <add>, %80, %cst_29 [1] : vector<8x8xf32> to vector<8xf32>
    %82 = vector.shape_cast %81 : vector<8xf32> to vector<8x1xf32>
    %83 = tpu.reciprocal %82 {approx = true} : vector<8x1xf32> -> vector<8x1xf32>
    %84 = vector.broadcast %83 : vector<8x1xf32> to vector<8x8xf32>
    %85 = arith.mulf %80, %84 : vector<8x8xf32>
    %86 = arith.truncf %85 : vector<8x8xf32> to vector<8x8xbf16>
    %cst_30 = arith.constant dense<0.000000e+00> : vector<8x8xf32>
    %87 = tpu.matmul %86, %72, %cst_30 {dimension_numbers = #tpu.dot_dimension_numbers<[1], [0], [0], [1], [0, 0, 1, 1], [], []>} : vector<8x8xbf16>, vector<8x8xbf16>, vector<8x8xf32> -> vector<8x8xf32>
    %88 = arith.truncf %87 : vector<8x8xf32> to vector<8x8xbf16>
    %89 = vector.extract_strided_slice %19 {offsets = [16, 0], sizes = [8, 32], strides = [1, 1]} : vector<32x32xbf16> to vector<8x32xbf16>
    %cst_31 = arith.constant dense<0.000000e+00> : vector<8x32xf32>
    %90 = tpu.matmul %88, %89, %cst_31 {dimension_numbers = #tpu.dot_dimension_numbers<[1], [0], [0], [1], [0, 0, 1, 1], [], []>} : vector<8x8xbf16>, vector<8x32xbf16>, vector<8x32xf32> -> vector<8x32xf32>
    %91 = arith.addf %69, %90 : vector<8x32xf32>
    %92 = vector.extract_strided_slice %22 {offsets = [0, 24], sizes = [8, 8], strides = [1, 1]} : vector<8x32xbf16> to vector<8x8xbf16>
    %93 = vector.extract_strided_slice %23 {offsets = [0, 24], sizes = [8, 8], strides = [1, 1]} : vector<8x32xbf16> to vector<8x8xbf16>
    %94 = vector.extract_strided_slice %24 {offsets = [0, 24], sizes = [8, 8], strides = [1, 1]} : vector<8x32xbf16> to vector<8x8xbf16>
    %cst_32 = arith.constant dense<0.000000e+00> : vector<8x8xf32>
    %95 = tpu.matmul %92, %93, %cst_32 {dimension_numbers = #tpu.dot_dimension_numbers<[1], [1], [0], [0], [0, 0, 1, 0], [], []>} : vector<8x8xbf16>, vector<8x8xbf16>, vector<8x8xf32> -> vector<8x8xf32>
    %96 = vector.broadcast %21 : vector<1x8xf32> to vector<8x8xf32>
    %97 = arith.addf %95, %96 : vector<8x8xf32>
    %cst_33 = arith.constant dense<0xFF800000> : vector<8xf32>
    %98 = vector.multi_reduction <maximumf>, %97, %cst_33 [1] : vector<8x8xf32> to vector<8xf32>
    %99 = vector.shape_cast %98 : vector<8xf32> to vector<8x1xf32>
    %100 = vector.broadcast %99 : vector<8x1xf32> to vector<8x8xf32>
    %101 = arith.subf %97, %100 : vector<8x8xf32>
    %102 = math.exp %101 : vector<8x8xf32>
    %cst_34 = arith.constant dense<0.000000e+00> : vector<8xf32>
    %103 = vector.multi_reduction <add>, %102, %cst_34 [1] : vector<8x8xf32> to vector<8xf32>
    %104 = vector.shape_cast %103 : vector<8xf32> to vector<8x1xf32>
    %105 = tpu.reciprocal %104 {approx = true} : vector<8x1xf32> -> vector<8x1xf32>
    %106 = vector.broadcast %105 : vector<8x1xf32> to vector<8x8xf32>
    %107 = arith.mulf %102, %106 : vector<8x8xf32>
    %108 = arith.truncf %107 : vector<8x8xf32> to vector<8x8xbf16>
    %cst_35 = arith.constant dense<0.000000e+00> : vector<8x8xf32>
    %109 = tpu.matmul %108, %94, %cst_35 {dimension_numbers = #tpu.dot_dimension_numbers<[1], [0], [0], [1], [0, 0, 1, 1], [], []>} : vector<8x8xbf16>, vector<8x8xbf16>, vector<8x8xf32> -> vector<8x8xf32>
    %110 = arith.truncf %109 : vector<8x8xf32> to vector<8x8xbf16>
    %111 = vector.extract_strided_slice %19 {offsets = [24, 0], sizes = [8, 32], strides = [1, 1]} : vector<32x32xbf16> to vector<8x32xbf16>
    %cst_36 = arith.constant dense<0.000000e+00> : vector<8x32xf32>
    %112 = tpu.matmul %110, %111, %cst_36 {dimension_numbers = #tpu.dot_dimension_numbers<[1], [0], [0], [1], [0, 0, 1, 1], [], []>} : vector<8x8xbf16>, vector<8x32xbf16>, vector<8x32xf32> -> vector<8x32xf32>
    %113 = arith.addf %91, %112 : vector<8x32xf32>
    %c0_37 = arith.constant 0 : index
    %c0_38 = arith.constant 0 : index
    %c0_39 = arith.constant 0 : index
    %114 = vector.load %arg7[%c0_37, %c0_38, %c0_39] : memref<1x1x32xf32, #tpu.memory_space<vmem>>, vector<1x1x32xf32>
    %115 = vector.shape_cast %114 : vector<1x1x32xf32> to vector<1x32xf32>
    %116 = vector.broadcast %115 : vector<1x32xf32> to vector<8x32xf32>
    %117 = arith.addf %113, %116 : vector<8x32xf32>
    %c0_40 = arith.constant 0 : index
    %c0_41 = arith.constant 0 : index
    %c0_42 = arith.constant 0 : index
    %118 = vector.load %arg8[%c0_40, %c0_41, %c0_42] : memref<1x1x32xf32, #tpu.memory_space<vmem>>, vector<1x1x32xf32>
    %119 = vector.shape_cast %118 : vector<1x1x32xf32> to vector<1x32xf32>
    %c0_43 = arith.constant 0 : index
    %c0_44 = arith.constant 0 : index
    %c0_45 = arith.constant 0 : index
    %120 = vector.load %arg9[%c0_43, %c0_44, %c0_45] : memref<1x1x32xf32, #tpu.memory_space<vmem>>, vector<1x1x32xf32>
    %121 = vector.shape_cast %120 : vector<1x1x32xf32> to vector<1x32xf32>
    %122 = arith.addf %4, %117 : vector<8x32xf32>
    %cst_46 = arith.constant dense<0.000000e+00> : vector<8xf32>
    %123 = vector.multi_reduction <add>, %122, %cst_46 [1] : vector<8x32xf32> to vector<8xf32>
    %124 = vector.shape_cast %123 : vector<8xf32> to vector<8x1xf32>
    %cst_47 = arith.constant 3.200000e+01 : f32
    %125 = vector.broadcast %cst_47 : f32 to vector<8x1xf32>
    %126 = arith.divf %124, %125 : vector<8x1xf32>
    %127 = vector.broadcast %126 : vector<8x1xf32> to vector<8x32xf32>
    %128 = arith.subf %122, %127 : vector<8x32xf32>
    %129 = arith.mulf %128, %128 : vector<8x32xf32>
    %cst_48 = arith.constant dense<0.000000e+00> : vector<8xf32>
    %130 = vector.multi_reduction <add>, %129, %cst_48 [1] : vector<8x32xf32> to vector<8xf32>
    %131 = vector.shape_cast %130 : vector<8xf32> to vector<8x1xf32>
    %cst_49 = arith.constant 3.200000e+01 : f32
    %132 = vector.broadcast %cst_49 : f32 to vector<8x1xf32>
    %133 = arith.divf %131, %132 : vector<8x1xf32>
    %134 = vector.broadcast %126 : vector<8x1xf32> to vector<8x32xf32>
    %135 = arith.subf %122, %134 : vector<8x32xf32>
    %cst_50 = arith.constant 9.99999974E-6 : f32
    %136 = vector.broadcast %cst_50 : f32 to vector<8x1xf32>
    %137 = arith.addf %133, %136 : vector<8x1xf32>
    %138 = math.rsqrt %137 : vector<8x1xf32>
    %139 = vector.broadcast %138 : vector<8x1xf32> to vector<8x32xf32>
    %140 = arith.mulf %135, %139 : vector<8x32xf32>
    %141 = vector.broadcast %119 : vector<1x32xf32> to vector<8x32xf32>
    %142 = arith.mulf %140, %141 : vector<8x32xf32>
    %143 = vector.broadcast %121 : vector<1x32xf32> to vector<8x32xf32>
    %144 = arith.addf %142, %143 : vector<8x32xf32>
    %145 = arith.truncf %144 : vector<8x32xf32> to vector<8x32xbf16>
    %c0_51 = arith.constant 0 : index
    %c0_52 = arith.constant 0 : index
    %c0_53 = arith.constant 0 : index
    %146 = vector.load %arg10[%c0_51, %c0_52, %c0_53] : memref<1x32x64xbf16, #tpu.memory_space<vmem>>, vector<1x32x64xbf16>
    %147 = vector.shape_cast %146 : vector<1x32x64xbf16> to vector<32x64xbf16>
    %cst_54 = arith.constant dense<0.000000e+00> : vector<8x64xf32>
    %148 = tpu.matmul %145, %147, %cst_54 {dimension_numbers = #tpu.dot_dimension_numbers<[1], [0], [0], [1], [0, 0, 1, 1], [], []>} : vector<8x32xbf16>, vector<32x64xbf16>, vector<8x64xf32> -> vector<8x64xf32>
    %c0_55 = arith.constant 0 : index
    %c0_56 = arith.constant 0 : index
    %c0_57 = arith.constant 0 : index
    %149 = vector.load %arg11[%c0_55, %c0_56, %c0_57] : memref<1x1x64xf32, #tpu.memory_space<vmem>>, vector<1x1x64xf32>
    %150 = vector.shape_cast %149 : vector<1x1x64xf32> to vector<1x64xf32>
    %151 = vector.broadcast %150 : vector<1x64xf32> to vector<8x64xf32>
    %152 = arith.addf %148, %151 : vector<8x64xf32>
    %cst_58 = arith.constant 0.000000e+00 : f32
    %153 = vector.broadcast %cst_58 : f32 to vector<8x64xf32>
    %154 = arith.maximumf %152, %153 : vector<8x64xf32>
    %155 = arith.truncf %154 : vector<8x64xf32> to vector<8x64xbf16>
    %c0_59 = arith.constant 0 : index
    %c0_60 = arith.constant 0 : index
    %c0_61 = arith.constant 0 : index
    %156 = vector.load %arg12[%c0_59, %c0_60, %c0_61] : memref<1x64x32xbf16, #tpu.memory_space<vmem>>, vector<1x64x32xbf16>
    %157 = vector.shape_cast %156 : vector<1x64x32xbf16> to vector<64x32xbf16>
    %cst_62 = arith.constant dense<0.000000e+00> : vector<8x32xf32>
    %158 = tpu.matmul %155, %157, %cst_62 {dimension_numbers = #tpu.dot_dimension_numbers<[1], [0], [0], [1], [0, 0, 1, 1], [], []>} : vector<8x64xbf16>, vector<64x32xbf16>, vector<8x32xf32> -> vector<8x32xf32>
    %c0_63 = arith.constant 0 : index
    %c0_64 = arith.constant 0 : index
    %c0_65 = arith.constant 0 : index
    %159 = vector.load %arg13[%c0_63, %c0_64, %c0_65] : memref<1x1x32xf32, #tpu.memory_space<vmem>>, vector<1x1x32xf32>
    %160 = vector.shape_cast %159 : vector<1x1x32xf32> to vector<1x32xf32>
    %161 = vector.broadcast %160 : vector<1x32xf32> to vector<8x32xf32>
    %162 = arith.addf %158, %161 : vector<8x32xf32>
    %c0_66 = arith.constant 0 : index
    %c0_67 = arith.constant 0 : index
    %c0_68 = arith.constant 0 : index
    %163 = vector.load %arg14[%c0_66, %c0_67, %c0_68] : memref<1x1x32xf32, #tpu.memory_space<vmem>>, vector<1x1x32xf32>
    %164 = vector.shape_cast %163 : vector<1x1x32xf32> to vector<1x32xf32>
    %c0_69 = arith.constant 0 : index
    %c0_70 = arith.constant 0 : index
    %c0_71 = arith.constant 0 : index
    %165 = vector.load %arg15[%c0_69, %c0_70, %c0_71] : memref<1x1x32xf32, #tpu.memory_space<vmem>>, vector<1x1x32xf32>
    %166 = vector.shape_cast %165 : vector<1x1x32xf32> to vector<1x32xf32>
    %167 = arith.addf %144, %162 : vector<8x32xf32>
    %cst_72 = arith.constant dense<0.000000e+00> : vector<8xf32>
    %168 = vector.multi_reduction <add>, %167, %cst_72 [1] : vector<8x32xf32> to vector<8xf32>
    %169 = vector.shape_cast %168 : vector<8xf32> to vector<8x1xf32>
    %cst_73 = arith.constant 3.200000e+01 : f32
    %170 = vector.broadcast %cst_73 : f32 to vector<8x1xf32>
    %171 = arith.divf %169, %170 : vector<8x1xf32>
    %172 = vector.broadcast %171 : vector<8x1xf32> to vector<8x32xf32>
    %173 = arith.subf %167, %172 : vector<8x32xf32>
    %174 = arith.mulf %173, %173 : vector<8x32xf32>
    %cst_74 = arith.constant dense<0.000000e+00> : vector<8xf32>
    %175 = vector.multi_reduction <add>, %174, %cst_74 [1] : vector<8x32xf32> to vector<8xf32>
    %176 = vector.shape_cast %175 : vector<8xf32> to vector<8x1xf32>
    %cst_75 = arith.constant 3.200000e+01 : f32
    %177 = vector.broadcast %cst_75 : f32 to vector<8x1xf32>
    %178 = arith.divf %176, %177 : vector<8x1xf32>
    %179 = vector.broadcast %171 : vector<8x1xf32> to vector<8x32xf32>
    %180 = arith.subf %167, %179 : vector<8x32xf32>
    %cst_76 = arith.constant 9.99999974E-6 : f32
    %181 = vector.broadcast %cst_76 : f32 to vector<8x1xf32>
    %182 = arith.addf %178, %181 : vector<8x1xf32>
    %183 = math.rsqrt %182 : vector<8x1xf32>
    %184 = vector.broadcast %183 : vector<8x1xf32> to vector<8x32xf32>
    %185 = arith.mulf %180, %184 : vector<8x32xf32>
    %186 = vector.broadcast %164 : vector<1x32xf32> to vector<8x32xf32>
    %187 = arith.mulf %185, %186 : vector<8x32xf32>
    %188 = vector.broadcast %166 : vector<1x32xf32> to vector<8x32xf32>
    %189 = arith.addf %187, %188 : vector<8x32xf32>
    %c0_77 = arith.constant 0 : index
    %c0_78 = arith.constant 0 : index
    %c0_79 = arith.constant 0 : index
    %190 = vector.load %arg16[%c0_77, %c0_78, %c0_79] : memref<1x8x32xf32, #tpu.memory_space<vmem>>, vector<1x8x32xf32>
    %191 = vector.shape_cast %190 : vector<1x8x32xf32> to vector<8x32xf32>
    %192 = vector.shape_cast %189 : vector<8x32xf32> to vector<1x8x32xf32>
    tpu.vector_store %arg16[%c0_77, %c0_78, %c0_79], %192 {strides = array<i32>} : memref<1x8x32xf32, #tpu.memory_space<vmem>>, vector<1x8x32xf32>,
    return
  }
  func.func @transform_0(%arg0: i32, %arg1: i32) -> (i32, i32, i32) {
    %c0_i32 = arith.constant 0 : i32
    %c0_i32_0 = arith.constant 0 : i32
    %c0_i32_1 = arith.constant 0 : i32
    return %arg0, %c0_i32, %c0_i32_0 : i32, i32, i32
  }
  func.func @transform_1(%arg0: i32, %arg1: i32) -> (i32, i32, i32) {
    %c0_i32 = arith.constant 0 : i32
    %c0_i32_0 = arith.constant 0 : i32
    %c0_i32_1 = arith.constant 0 : i32
    return %arg0, %c0_i32, %c0_i32_0 : i32, i32, i32
  }
  func.func @transform_2(%arg0: i32, %arg1: i32) -> (i32, i32, i32) {
    %c0_i32 = arith.constant 0 : i32
    %c0_i32_0 = arith.constant 0 : i32
    %c0_i32_1 = arith.constant 0 : i32
    return %arg1, %c0_i32, %c0_i32_0 : i32, i32, i32
  }
  func.func @transform_3(%arg0: i32, %arg1: i32) -> (i32, i32, i32) {
    %c0_i32 = arith.constant 0 : i32
    %c0_i32_0 = arith.constant 0 : i32
    %c0_i32_1 = arith.constant 0 : i32
    return %arg1, %c0_i32, %c0_i32_0 : i32, i32, i32
  }
  func.func @transform_4(%arg0: i32, %arg1: i32) -> (i32, i32, i32) {
    %c0_i32 = arith.constant 0 : i32
    %c0_i32_0 = arith.constant 0 : i32
    %c0_i32_1 = arith.constant 0 : i32
    return %arg1, %c0_i32, %c0_i32_0 : i32, i32, i32
  }
  func.func @transform_5(%arg0: i32, %arg1: i32) -> (i32, i32, i32) {
    %c0_i32 = arith.constant 0 : i32
    %c0_i32_0 = arith.constant 0 : i32
    %c0_i32_1 = arith.constant 0 : i32
    return %arg1, %c0_i32, %c0_i32_0 : i32, i32, i32
  }
  func.func @transform_6(%arg0: i32, %arg1: i32) -> (i32, i32, i32) {
    %c0_i32 = arith.constant 0 : i32
    %c0_i32_0 = arith.constant 0 : i32
    %c0_i32_1 = arith.constant 0 : i32
    return %arg1, %c0_i32, %c0_i32_0 : i32, i32, i32
  }
  func.func @transform_7(%arg0: i32, %arg1: i32) -> (i32, i32, i32) {
    %c0_i32 = arith.constant 0 : i32
    %c0_i32_0 = arith.constant 0 : i32
    %c0_i32_1 = arith.constant 0 : i32
    return %arg1, %c0_i32, %c0_i32_0 : i32, i32, i32
  }
  func.func @transform_8(%arg0: i32, %arg1: i32) -> (i32, i32, i32) {
    %c0_i32 = arith.constant 0 : i32
    %c0_i32_0 = arith.constant 0 : i32
    %c0_i32_1 = arith.constant 0 : i32
    return %arg1, %c0_i32, %c0_i32_0 : i32, i32, i32
  }
  func.func @transform_9(%arg0: i32, %arg1: i32) -> (i32, i32, i32) {
    %c0_i32 = arith.constant 0 : i32
    %c0_i32_0 = arith.constant 0 : i32
    %c0_i32_1 = arith.constant 0 : i32
    return %arg1, %c0_i32, %c0_i32_0 : i32, i32, i32
  }
  func.func @transform_10(%arg0: i32, %arg1: i32) -> (i32, i32, i32) {
    %c0_i32 = arith.constant 0 : i32
    %c0_i32_0 = arith.constant 0 : i32
    %c0_i32_1 = arith.constant 0 : i32
    return %arg1, %c0_i32, %c0_i32_0 : i32, i32, i32
  }
  func.func @transform_11(%arg0: i32, %arg1: i32) -> (i32, i32, i32) {
    %c0_i32 = arith.constant 0 : i32
    %c0_i32_0 = arith.constant 0 : i32
    %c0_i32_1 = arith.constant 0 : i32
    return %arg1, %c0_i32, %c0_i32_0 : i32, i32, i32
  }
  func.func @transform_12(%arg0: i32, %arg1: i32) -> (i32, i32, i32) {
    %c0_i32 = arith.constant 0 : i32
    %c0_i32_0 = arith.constant 0 : i32
    %c0_i32_1 = arith.constant 0 : i32
    return %arg1, %c0_i32, %c0_i32_0 : i32, i32, i32
  }
  func.func @transform_13(%arg0: i32, %arg1: i32) -> (i32, i32, i32) {
    %c0_i32 = arith.constant 0 : i32
    %c0_i32_0 = arith.constant 0 : i32
    %c0_i32_1 = arith.constant 0 : i32
    return %arg1, %c0_i32, %c0_i32_0 : i32, i32, i32
  }
  func.func @transform_14(%arg0: i32, %arg1: i32) -> (i32, i32, i32) {
    %c0_i32 = arith.constant 0 : i32
    %c0_i32_0 = arith.constant 0 : i32
    %c0_i32_1 = arith.constant 0 : i32
    return %arg0, %c0_i32, %c0_i32_0 : i32, i32, i32
  }
}

</mosaic_0001>

<llo_original>
// kernel: tpu_custom_call.1
$region0: #{tpu_custom_call.1}
  #allocation0 [shape = 'u32[]', space=smem, size = 0x4, offset = 0x4, fixed_abs, tag = 'smem constant byte address 0x4 - core index']
  #allocation1 [shape = 'u32[144,128]{1,0:T(1,128)}', space=vmem, size = 0x12000, scoped, tag = 'internal scratch']
  %s0 = inlined_call_operand.hbm [shape: f32[2,8,32], index: 0, kind: input, shape index: {}]
  %s1 = inlined_call_operand.hbm [shape: f32[2,1,8], index: 1, kind: input, shape index: {}]
  %s2 = inlined_call_operand.vmem [shape: bf16[2,32,96], index: 2, kind: input, shape index: {}]
  %s3 = inlined_call_operand.vmem [shape: f32[2,1,96], index: 3, kind: input, shape index: {}]
  %s4 = inlined_call_operand.vmem [shape: bf16[2,32,32], index: 4, kind: input, shape index: {}]
  %s5 = inlined_call_operand.vmem [shape: f32[2,1,32], index: 5, kind: input, shape index: {}]
  %s6 = inlined_call_operand.vmem [shape: f32[2,1,32], index: 6, kind: input, shape index: {}]
  %s7 = inlined_call_operand.vmem [shape: f32[2,1,32], index: 7, kind: input, shape index: {}]
  %s8 = inlined_call_operand.vmem [shape: bf16[2,32,64], index: 8, kind: input, shape index: {}]
  %s9 = inlined_call_operand.vmem [shape: f32[2,1,64], index: 9, kind: input, shape index: {}]
  %s10 = inlined_call_operand.vmem [shape: bf16[2,64,32], index: 10, kind: input, shape index: {}]
  %s11 = inlined_call_operand.vmem [shape: f32[2,1,32], index: 11, kind: input, shape index: {}]
  %s12 = inlined_call_operand.vmem [shape: f32[2,1,32], index: 12, kind: input, shape index: {}]
  %s13 = inlined_call_operand.vmem [shape: f32[2,1,32], index: 13, kind: input, shape index: {}]
  %s14 = inlined_call_operand.hbm [shape: f32[2,8,32], index: 14, kind: output, shape index: {}]
  %s15 = sld [smem:[#allocation0]]
  $region101: #{tpu_custom_call.1} parent=0
    _
  %s17 = ssub.s32 1, %s15
  %s18 = scalar_select 0, %s17, %s15
  $region1: #{tpu_custom_call.1} parent=0
    #allocation2 [shape = 'u8[8192]{0}', space=vmem, size = 0x2000, scoped, tag = 'input window, operand 0']
    #allocation3 [shape = 's32[2]{0}', space=sflag, size = 0x8, scoped, tag = 'scoped memory for tpu_custom_call.1']
    #allocation4 [shape = 's32[2]{0}', space=sflag, size = 0x8, scoped, tag = 'scoped memory for tpu_custom_call.1']
    #allocation5 [shape = 'u8[1024]{0}', space=vmem, size = 0x400, scoped, tag = 'input window, operand 1']
    #allocation6 [shape = 's32[2]{0}', space=sflag, size = 0x8, scoped, tag = 'scoped memory for tpu_custom_call.1']
    #allocation7 [shape = 'u8[8192]{0}', space=vmem, size = 0x2000, scoped, tag = 'output window, operand 0']
    %19 = vsyncpa [#allocation3], 0
    %s20 = scalar_lea.sflag [#allocation3], 1
    %21 = vsyncpa %s20, 0
    %22 = vsyncpa [#allocation6], 0
    %s23 = scalar_lea.sflag [#allocation6], 1
    %24 = vsyncpa %s23, 0
    %25 = vsyncpa [#allocation4], 0
    %s26 = scalar_lea.sflag [#allocation4], 1
    %27 = vsyncpa %s26, 0
    loop: start=0, step=1, limit=6
    $region2: #{tpu_custom_call.1} parent=1 // loop_pre_header
      _
    $region3: #{tpu_custom_call.1} parent=1 // loop_header
      %s29 = sphi 0, %s33
      %p30 = scmp.ge.s32.totalorder %s29, 6
      %s36 = sphi 0, %s48
      %s37 = sphi 0, %s44
      %s38 = sphi 0, %s36
      %s39 = sphi 0, %s37
      %s40 = sphi 0, %s38
      %s41 = sphi 0, %s39
      %s51 = sphi 0, %s53
      %s54 = sphi 0, %s51
      %s55 = sphi 0, %s54
      %s71 = sphi 0, %s55
      %s77 = sphi 0, %s79
      %s80 = sphi 0, %s77
      %s81 = sphi 0, %s80
      %s97 = sphi 0, %s81
      %s103 = sphi 0, %s105
      %s106 = sphi 0, %s103
      %s107 = sphi 0, %s106
      %s123 = sphi 0, %s107
      %s129 = sphi 0, %s131
      %s132 = sphi 0, %s129
      %s133 = sphi 0, %s132
      %s149 = sphi 0, %s133
      %s155 = sphi 0, %s157
      %s158 = sphi 0, %s155
      %s159 = sphi 0, %s158
      %s175 = sphi 0, %s159
      %s181 = sphi 0, %s183
      %s184 = sphi 0, %s181
      %s185 = sphi 0, %s184
      %s201 = sphi 0, %s185
      %s207 = sphi 0, %s209
      %s210 = sphi 0, %s207
      %s211 = sphi 0, %s210
      %s227 = sphi 0, %s211
      %s233 = sphi 0, %s235
      %s236 = sphi 0, %s233
      %s237 = sphi 0, %s236
      %s253 = sphi 0, %s237
      %s259 = sphi 0, %s261
      %s262 = sphi 0, %s259
      %s263 = sphi 0, %s262
      %s279 = sphi 0, %s263
      %s285 = sphi 0, %s287
      %s288 = sphi 0, %s285
      %s289 = sphi 0, %s288
      %s305 = sphi 0, %s289
      %s311 = sphi 0, %s313
      %s314 = sphi 0, %s311
      %s315 = sphi 0, %s314
      %s331 = sphi 0, %s315
      %s337 = sphi 0, %s339
      %s340 = sphi 0, %s337
      %s341 = sphi 0, %s340
      %s357 = sphi 0, %s341
      %s363 = sphi 0, %s365
      %s366 = sphi 0, %s363
      %s367 = sphi 0, %s366
      %s383 = sphi 0, %s367
      %s389 = sphi 0, %s391
      %s392 = sphi 0, %s389
      %s393 = sphi 0, %s392
      %s409 = sphi 0, %s393
      %s415 = sphi 0, %s417
      %s418 = sphi 0, %s415
      %s419 = sphi 0, %s418
      %s435 = sphi 0, %s419
    $region4: #{tpu_custom_call.1} parent=1 // loop_header_branch
      %32 = sbr.rel (%p30) target = $region8
    $region5: #{tpu_custom_call.1} parent=1 // loop_body
      %s34 = ssub.s32 %s29, 1
      %s35 = ssub.s32 %s29, 2
      %s42 = sadd.s32 1, %s37
      %p43 = scmp.ge.s32.totalorder %s42, 2
      %s44 = scalar_select %p43, 0, %s42
      %s45 = sadd.s32 1, %s36
      %s46 = scalar_select %p43, %s45, %s36
      %p47 = scmp.ge.s32.totalorder %s46, 2
      %s48 = scalar_select %p47, 0, %s46
      %s49 = ssub.s32 %s36, %s48
      %p50 = scmp.eq.s32.totalorder %s49, 0
      %s52 = sadd.s32 %s51, 1
      %s53 = scalar_select %p50, %s51, %s52
      %p56 = pneg %p50
      %p57 = scmp.eq.s32.totalorder %s29, 3
      %p58 = por %p56, %p57
      %p59 = scmp.ne.s32.totalorder %s51, %s54
      %p60 = scmp.eq.s32.totalorder %s29, 0
      %p61 = por %p59, %p60
      %p62 = scmp.ne.s32.totalorder %s51, %s54
      %p63 = scmp.eq.s32.totalorder %s34, 3
      %p64 = por %p62, %p63
      %p65 = scmp.ne.s32.totalorder %s54, %s55
      %p66 = scmp.eq.s32.totalorder %s34, 0
      %p67 = por %p65, %p66
      %p68 = scmp.ne.s32.totalorder %s54, %s55
      %p69 = scmp.eq.s32.totalorder %s35, 3
      %p70 = por %p68, %p69
      %p72 = scmp.ne.s32.totalorder %s55, %s71
      %p73 = scmp.eq.s32.totalorder %s35, 0
      %p74 = por %p72, %p73
      %s75 = ssub.s32 %s36, %s48
      %p76 = scmp.eq.s32.totalorder %s75, 0
      %s78 = sadd.s32 %s77, 1
      %s79 = scalar_select %p76, %s77, %s78
      %p82 = pneg %p76
      %p83 = scmp.eq.s32.totalorder %s29, 3
      %p84 = por %p82, %p83
      %p85 = scmp.ne.s32.totalorder %s77, %s80
      %p86 = scmp.eq.s32.totalorder %s29, 0
      %p87 = por %p85, %p86
      %p88 = scmp.ne.s32.totalorder %s77, %s80
      %p89 = scmp.eq.s32.totalorder %s34, 3
      %p90 = por %p88, %p89
      %p91 = scmp.ne.s32.totalorder %s80, %s81
      %p92 = scmp.eq.s32.totalorder %s34, 0
      %p93 = por %p91, %p92
      %p94 = scmp.ne.s32.totalorder %s80, %s81
      %p95 = scmp.eq.s32.totalorder %s35, 3
      %p96 = por %p94, %p95
      %p98 = scmp.ne.s32.totalorder %s81, %s97
      %p99 = scmp.eq.s32.totalorder %s35, 0
      %p100 = por %p98, %p99
      %s101 = ssub.s32 %s37, %s44
      %p102 = scmp.eq.s32.totalorder %s101, 0
      %s104 = sadd.s32 %s103, 1
      %s105 = scalar_select %p102, %s103, %s104
      %p108 = pneg %p102
      %p109 = scmp.eq.s32.totalorder %s29, 3
      %p110 = por %p108, %p109
      %p111 = scmp.ne.s32.totalorder %s103, %s106
      %p112 = scmp.eq.s32.totalorder %s29, 0
      %p113 = por %p111, %p112
      %p114 = scmp.ne.s32.totalorder %s103, %s106
      %p115 = scmp.eq.s32.totalorder %s34, 3
      %p116 = por %p114, %p115
      %p117 = scmp.ne.s32.totalorder %s106, %s107
      %p118 = scmp.eq.s32.totalorder %s34, 0
      %p119 = por %p117, %p118
      %p120 = scmp.ne.s32.totalorder %s106, %s107
      %p121 = scmp.eq.s32.totalorder %s35, 3
      %p122 = por %p120, %p121
      %p124 = scmp.ne.s32.totalorder %s107, %s123
      %p125 = scmp.eq.s32.totalorder %s35, 0
      %p126 = por %p124, %p125
      %s127 = ssub.s32 %s37, %s44
      %p128 = scmp.eq.s32.totalorder %s127, 0
      %s130 = sadd.s32 %s129, 1
      %s131 = scalar_select %p128, %s129, %s130
      %p134 = pneg %p128
      %p135 = scmp.eq.s32.totalorder %s29, 3
      %p136 = por %p134, %p135
      %p137 = scmp.ne.s32.totalorder %s129, %s132
      %p138 = scmp.eq.s32.totalorder %s29, 0
      %p139 = por %p137, %p138
      %p140 = scmp.ne.s32.totalorder %s129, %s132
      %p141 = scmp.eq.s32.totalorder %s34, 3
      %p142 = por %p140, %p141
      %p143 = scmp.ne.s32.totalorder %s132, %s133
      %p144 = scmp.eq.s32.totalorder %s34, 0
      %p145 = por %p143, %p144
      %p146 = scmp.ne.s32.totalorder %s132, %s133
      %p147 = scmp.eq.s32.totalorder %s35, 3
      %p148 = por %p146, %p147
      %p150 = scmp.ne.s32.totalorder %s133, %s149
      %p151 = scmp.eq.s32.totalorder %s35, 0
      %p152 = por %p150, %p151
      %s153 = ssub.s32 %s37, %s44
      %p154 = scmp.eq.s32.totalorder %s153, 0
      %s156 = sadd.s32 %s155, 1
      %s157 = scalar_select %p154, %s155, %s156
      %p160 = pneg %p154
      %p161 = scmp.eq.s32.totalorder %s29, 3
      %p162 = por %p160, %p161
      %p163 = scmp.ne.s32.totalorder %s155, %s158
      %p164 = scmp.eq.s32.totalorder %s29, 0
      %p165 = por %p163, %p164
      %p166 = scmp.ne.s32.totalorder %s155, %s158
      %p167 = scmp.eq.s32.totalorder %s34, 3
      %p168 = por %p166, %p167
      %p169 = scmp.ne.s32.totalorder %s158, %s159
      %p170 = scmp.eq.s32.totalorder %s34, 0
      %p171 = por %p169, %p170
      %p172 = scmp.ne.s32.totalorder %s158, %s159
      %p173 = scmp.eq.s32.totalorder %s35, 3
      %p174 = por %p172, %p173
      %p176 = scmp.ne.s32.totalorder %s159, %s175
      %p177 = scmp.eq.s32.totalorder %s35, 0
      %p178 = por %p176, %p177
      %s179 = ssub.s32 %s37, %s44
      %p180 = scmp.eq.s32.totalorder %s179, 0
      %s182 = sadd.s32 %s181, 1
      %s183 = scalar_select %p180, %s181, %s182
      %p186 = pneg %p180
      %p187 = scmp.eq.s32.totalorder %s29, 3
      %p188 = por %p186, %p187
      %p189 = scmp.ne.s32.totalorder %s181, %s184
      %p190 = scmp.eq.s32.totalorder %s29, 0
      %p191 = por %p189, %p190
      %p192 = scmp.ne.s32.totalorder %s181, %s184
      %p193 = scmp.eq.s32.totalorder %s34, 3
      %p194 = por %p192, %p193
      %p195 = scmp.ne.s32.totalorder %s184, %s185
      %p196 = scmp.eq.s32.totalorder %s34, 0
      %p197 = por %p195, %p196
      %p198 = scmp.ne.s32.totalorder %s184, %s185
      %p199 = scmp.eq.s32.totalorder %s35, 3
      %p200 = por %p198, %p199
      %p202 = scmp.ne.s32.totalorder %s185, %s201
      %p203 = scmp.eq.s32.totalorder %s35, 0
      %p204 = por %p202, %p203
      %s205 = ssub.s32 %s37, %s44
      %p206 = scmp.eq.s32.totalorder %s205, 0
      %s208 = sadd.s32 %s207, 1
      %s209 = scalar_select %p206, %s207, %s208
      %p212 = pneg %p206
      %p213 = scmp.eq.s32.totalorder %s29, 3
      %p214 = por %p212, %p213
      %p215 = scmp.ne.s32.totalorder %s207, %s210
      %p216 = scmp.eq.s32.totalorder %s29, 0
      %p217 = por %p215, %p216
      %p218 = scmp.ne.s32.totalorder %s207, %s210
      %p219 = scmp.eq.s32.totalorder %s34, 3
      %p220 = por %p218, %p219
      %p221 = scmp.ne.s32.totalorder %s210, %s211
      %p222 = scmp.eq.s32.totalorder %s34, 0
      %p223 = por %p221, %p222
      %p224 = scmp.ne.s32.totalorder %s210, %s211
      %p225 = scmp.eq.s32.totalorder %s35, 3
      %p226 = por %p224, %p225
      %p228 = scmp.ne.s32.totalorder %s211, %s227
      %p229 = scmp.eq.s32.totalorder %s35, 0
      %p230 = por %p228, %p229
      %s231 = ssub.s32 %s37, %s44
      %p232 = scmp.eq.s32.totalorder %s231, 0
      %s234 = sadd.s32 %s233, 1
      %s235 = scalar_select %p232, %s233, %s234
      %p238 = pneg %p232
      %p239 = scmp.eq.s32.totalorder %s29, 3
      %p240 = por %p238, %p239
      %p241 = scmp.ne.s32.totalorder %s233, %s236
      %p242 = scmp.eq.s32.totalorder %s29, 0
      %p243 = por %p241, %p242
      %p244 = scmp.ne.s32.totalorder %s233, %s236
      %p245 = scmp.eq.s32.totalorder %s34, 3
      %p246 = por %p244, %p245
      %p247 = scmp.ne.s32.totalorder %s236, %s237
      %p248 = scmp.eq.s32.totalorder %s34, 0
      %p249 = por %p247, %p248
      %p250 = scmp.ne.s32.totalorder %s236, %s237
      %p251 = scmp.eq.s32.totalorder %s35, 3
      %p252 = por %p250, %p251
      %p254 = scmp.ne.s32.totalorder %s237, %s253
      %p255 = scmp.eq.s32.totalorder %s35, 0
      %p256 = por %p254, %p255
      %s257 = ssub.s32 %s37, %s44
      %p258 = scmp.eq.s32.totalorder %s257, 0
      %s260 = sadd.s32 %s259, 1
      %s261 = scalar_select %p258, %s259, %s260
      %p264 = pneg %p258
      %p265 = scmp.eq.s32.totalorder %s29, 3
      %p266 = por %p264, %p265
      %p267 = scmp.ne.s32.totalorder %s259, %s262
      %p268 = scmp.eq.s32.totalorder %s29, 0
      %p269 = por %p267, %p268
      %p270 = scmp.ne.s32.totalorder %s259, %s262
      %p271 = scmp.eq.s32.totalorder %s34, 3
      %p272 = por %p270, %p271
      %p273 = scmp.ne.s32.totalorder %s262, %s263
      %p274 = scmp.eq.s32.totalorder %s34, 0
      %p275 = por %p273, %p274
      %p276 = scmp.ne.s32.totalorder %s262, %s263
      %p277 = scmp.eq.s32.totalorder %s35, 3
      %p278 = por %p276, %p277
      %p280 = scmp.ne.s32.totalorder %s263, %s279
      %p281 = scmp.eq.s32.totalorder %s35, 0
      %p282 = por %p280, %p281
      %s283 = ssub.s32 %s37, %s44
      %p284 = scmp.eq.s32.totalorder %s283, 0
      %s286 = sadd.s32 %s285, 1
      %s287 = scalar_select %p284, %s285, %s286
      %p290 = pneg %p284
      %p291 = scmp.eq.s32.totalorder %s29, 3
      %p292 = por %p290, %p291
      %p293 = scmp.ne.s32.totalorder %s285, %s288
      %p294 = scmp.eq.s32.totalorder %s29, 0
      %p295 = por %p293, %p294
      %p296 = scmp.ne.s32.totalorder %s285, %s288
      %p297 = scmp.eq.s32.totalorder %s34, 3
      %p298 = por %p296, %p297
      %p299 = scmp.ne.s32.totalorder %s288, %s289
      %p300 = scmp.eq.s32.totalorder %s34, 0
      %p301 = por %p299, %p300
      %p302 = scmp.ne.s32.totalorder %s288, %s289
      %p303 = scmp.eq.s32.totalorder %s35, 3
      %p304 = por %p302, %p303
      %p306 = scmp.ne.s32.totalorder %s289, %s305
      %p307 = scmp.eq.s32.totalorder %s35, 0
      %p308 = por %p306, %p307
      %s309 = ssub.s32 %s37, %s44
      %p310 = scmp.eq.s32.totalorder %s309, 0
      %s312 = sadd.s32 %s311, 1
      %s313 = scalar_select %p310, %s311, %s312
      %p316 = pneg %p310
      %p317 = scmp.eq.s32.totalorder %s29, 3
      %p318 = por %p316, %p317
      %p319 = scmp.ne.s32.totalorder %s311, %s314
      %p320 = scmp.eq.s32.totalorder %s29, 0
      %p321 = por %p319, %p320
      %p322 = scmp.ne.s32.totalorder %s311, %s314
      %p323 = scmp.eq.s32.totalorder %s34, 3
      %p324 = por %p322, %p323
      %p325 = scmp.ne.s32.totalorder %s314, %s315
      %p326 = scmp.eq.s32.totalorder %s34, 0
      %p327 = por %p325, %p326
      %p328 = scmp.ne.s32.totalorder %s314, %s315
      %p329 = scmp.eq.s32.totalorder %s35, 3
      %p330 = por %p328, %p329
      %p332 = scmp.ne.s32.totalorder %s315, %s331
      %p333 = scmp.eq.s32.totalorder %s35, 0
      %p334 = por %p332, %p333
      %s335 = ssub.s32 %s37, %s44
      %p336 = scmp.eq.s32.totalorder %s335, 0
      %s338 = sadd.s32 %s337, 1
      %s339 = scalar_select %p336, %s337, %s338
      %p342 = pneg %p336
      %p343 = scmp.eq.s32.totalorder %s29, 3
      %p344 = por %p342, %p343
      %p345 = scmp.ne.s32.totalorder %s337, %s340
      %p346 = scmp.eq.s32.totalorder %s29, 0
      %p347 = por %p345, %p346
      %p348 = scmp.ne.s32.totalorder %s337, %s340
      %p349 = scmp.eq.s32.totalorder %s34, 3
      %p350 = por %p348, %p349
      %p351 = scmp.ne.s32.totalorder %s340, %s341
      %p352 = scmp.eq.s32.totalorder %s34, 0
      %p353 = por %p351, %p352
      %p354 = scmp.ne.s32.totalorder %s340, %s341
      %p355 = scmp.eq.s32.totalorder %s35, 3
      %p356 = por %p354, %p355
      %p358 = scmp.ne.s32.totalorder %s341, %s357
      %p359 = scmp.eq.s32.totalorder %s35, 0
      %p360 = por %p358, %p359
      %s361 = ssub.s32 %s37, %s44
      %p362 = scmp.eq.s32.totalorder %s361, 0
      %s364 = sadd.s32 %s363, 1
      %s365 = scalar_select %p362, %s363, %s364
      %p368 = pneg %p362
      %p369 = scmp.eq.s32.totalorder %s29, 3
      %p370 = por %p368, %p369
      %p371 = scmp.ne.s32.totalorder %s363, %s366
      %p372 = scmp.eq.s32.totalorder %s29, 0
      %p373 = por %p371, %p372
      %p374 = scmp.ne.s32.totalorder %s363, %s366
      %p375 = scmp.eq.s32.totalorder %s34, 3
      %p376 = por %p374, %p375
      %p377 = scmp.ne.s32.totalorder %s366, %s367
      %p378 = scmp.eq.s32.totalorder %s34, 0
      %p379 = por %p377, %p378
      %p380 = scmp.ne.s32.totalorder %s366, %s367
      %p381 = scmp.eq.s32.totalorder %s35, 3
      %p382 = por %p380, %p381
      %p384 = scmp.ne.s32.totalorder %s367, %s383
      %p385 = scmp.eq.s32.totalorder %s35, 0
      %p386 = por %p384, %p385
      %s387 = ssub.s32 %s37, %s44
      %p388 = scmp.eq.s32.totalorder %s387, 0
      %s390 = sadd.s32 %s389, 1
      %s391 = scalar_select %p388, %s389, %s390
      %p394 = pneg %p388
      %p395 = scmp.eq.s32.totalorder %s29, 3
      %p396 = por %p394, %p395
      %p397 = scmp.ne.s32.totalorder %s389, %s392
      %p398 = scmp.eq.s32.totalorder %s29, 0
      %p399 = por %p397, %p398
      %p400 = scmp.ne.s32.totalorder %s389, %s392
      %p401 = scmp.eq.s32.totalorder %s34, 3
      %p402 = por %p400, %p401
      %p403 = scmp.ne.s32.totalorder %s392, %s393
      %p404 = scmp.eq.s32.totalorder %s34, 0
      %p405 = por %p403, %p404
      %p406 = scmp.ne.s32.totalorder %s392, %s393
      %p407 = scmp.eq.s32.totalorder %s35, 3
      %p408 = por %p406, %p407
      %p410 = scmp.ne.s32.totalorder %s393, %s409
      %p411 = scmp.eq.s32.totalorder %s35, 0
      %p412 = por %p410, %p411
      %s413 = ssub.s32 %s36, %s48
      %p414 = scmp.eq.s32.totalorder %s413, 0
      %s416 = sadd.s32 %s415, 1
      %s417 = scalar_select %p414, %s415, %s416
      %p420 = pneg %p414
      %p421 = scmp.eq.s32.totalorder %s29, 3
      %p422 = por %p420, %p421
      %p423 = scmp.ne.s32.totalorder %s415, %s418
      %p424 = scmp.eq.s32.totalorder %s29, 0
      %p425 = por %p423, %p424
      %p426 = scmp.ne.s32.totalorder %s415, %s418
      %p427 = scmp.eq.s32.totalorder %s34, 3
      %p428 = por %p426, %p427
      %p429 = scmp.ne.s32.totalorder %s418, %s419
      %p430 = scmp.eq.s32.totalorder %s34, 0
      %p431 = por %p429, %p430
      %p432 = scmp.ne.s32.totalorder %s418, %s419
      %p433 = scmp.eq.s32.totalorder %s35, 3
      %p434 = por %p432, %p433
      %p436 = scmp.ne.s32.totalorder %s419, %s435
      %p437 = scmp.eq.s32.totalorder %s35, 0
      %p438 = por %p436, %p437
      %p439 = scmp.le.s32.totalorder 1, %s29
      %p440 = scmp.lt.s32.totalorder %s29, 5
      %p441 = pnand %p439, %p440
      %p442 = pneg %p441
      // Predicated region
      $region9: #{tpu_custom_call.1} parent=5 // pred_check
        _
      $region10: #{tpu_custom_call.1} parent=5 // pred_check_branch
        %444 = sbr.rel (%p441) target = $region12
      $region11: #{tpu_custom_call.1} parent=5 // pred_region
        %s445 = ssub.s32 %s29, 1
      $region12: #{tpu_custom_call.1} parent=5 // pred_fallthru
        _
      %p446 = scmp.lt.s32.totalorder %s29, 4
      // Predicated region
      $region13: #{tpu_custom_call.1} parent=5 // pred_check
        %p447 = pneg %p446
      $region14: #{tpu_custom_call.1} parent=5 // pred_check_branch
        %449 = sbr.rel (%p447) target = $region16
      $region15: #{tpu_custom_call.1} parent=5 // pred_region
        // Predicated region
        $region17: #{tpu_custom_call.1} parent=15 // pred_check
          %p450 = pneg %p61
        $region18: #{tpu_custom_call.1} parent=15 // pred_check_branch
          %452 = sbr.rel (%p450) target = $region20
        $region19: #{tpu_custom_call.1} parent=15 // pred_region
          %s453 = sand.u32 %s51, 1
          %s454 = scalar_lea.sflag [#allocation3], %s453
          %s455 = sand.u32 %s51, 1
          %s456 = smul.addr %s455, 8
          %s457 = scalar_lea.vmem [#allocation2], %s456
          %s459 = ssub.s32 128, 128
          %460 = vsyncadd %s454, %s459
          %s461 = smul.addr %s36, 128
          %s462 = scalar_lea.hbm %s0, %s461
          %s464 = sshll.u32 %s457, 4
          %s465 = int_to_ptr.vmem [resolvable:$true] %s464
          %467 = dma.hbm_to_vmem [thread:$0]  %s462, 128, %s465, %s454
        $region20: #{tpu_custom_call.1} parent=15 // pred_fallthru
          _
        // Predicated region
        $region21: #{tpu_custom_call.1} parent=15 // pred_check
          %p468 = pneg %p87
        $region22: #{tpu_custom_call.1} parent=15 // pred_check_branch
          %470 = sbr.rel (%p468) target = $region24
        $region23: #{tpu_custom_call.1} parent=15 // pred_region
          %s471 = sand.u32 %s77, 1
          %s472 = scalar_lea.sflag [#allocation6], %s471
          %s473 = sand.u32 %s77, 1
          %s474 = scalar_lea.vmem [#allocation5], %s473
          %s476 = ssub.s32 16, 16
          %477 = vsyncadd %s472, %s476
          %s478 = smul.addr %s36, 16
          %s479 = scalar_lea.hbm %s1, %s478
          %s481 = sshll.u32 %s474, 4
          %s482 = int_to_ptr.vmem [resolvable:$true] %s481
          %484 = dma.hbm_to_vmem [thread:$0]  %s479, 16, %s482, %s472
        $region24: #{tpu_custom_call.1} parent=15 // pred_fallthru
          _
        // Predicated region
        $region25: #{tpu_custom_call.1} parent=15 // pred_check
          %p485 = pneg %p113
        $region26: #{tpu_custom_call.1} parent=15 // pred_check_branch
          %487 = sbr.rel (%p485) target = $region28
        $region27: #{tpu_custom_call.1} parent=15 // pred_region
          %p488 = scmp.lt.s32.totalorder %s37, 1
          %s489 = scalar_select %p488, %s37, 1
          %s490 = smul.addr %s489, 4
          %s491 = smul.addr %s490, 4
          %s492 = scalar_lea.vmem %s2, %s491
        $region28: #{tpu_custom_call.1} parent=15 // pred_fallthru
          _
        // Predicated region
        $region29: #{tpu_custom_call.1} parent=15 // pred_check
          %p493 = pneg %p139
        $region30: #{tpu_custom_call.1} parent=15 // pred_check_branch
          %495 = sbr.rel (%p493) target = $region32
        $region31: #{tpu_custom_call.1} parent=15 // pred_region
          %p496 = scmp.lt.s32.totalorder %s37, 1
          %s497 = scalar_select %p496, %s37, 1
          %s498 = scalar_lea.vmem %s3, %s497
        $region32: #{tpu_custom_call.1} parent=15 // pred_fallthru
          _
        // Predicated region
        $region33: #{tpu_custom_call.1} parent=15 // pred_check
          %p499 = pneg %p165
        $region34: #{tpu_custom_call.1} parent=15 // pred_check_branch
          %501 = sbr.rel (%p499) target = $region36
        $region35: #{tpu_custom_call.1} parent=15 // pred_region
          %p502 = scmp.lt.s32.totalorder %s37, 1
          %s503 = scalar_select %p502, %s37, 1
          %s504 = smul.addr %s503, 4
          %s505 = smul.addr %s504, 4
          %s506 = scalar_lea.vmem %s4, %s505
        $region36: #{tpu_custom_call.1} parent=15 // pred_fallthru
          _
        // Predicated region
        $region37: #{tpu_custom_call.1} parent=15 // pred_check
          %p507 = pneg %p191
        $region38: #{tpu_custom_call.1} parent=15 // pred_check_branch
          %509 = sbr.rel (%p507) target = $region40
        $region39: #{tpu_custom_call.1} parent=15 // pred_region
          %p510 = scmp.lt.s32.totalorder %s37, 1
          %s511 = scalar_select %p510, %s37, 1
          %s512 = scalar_lea.vmem %s5, %s511
        $region40: #{tpu_custom_call.1} parent=15 // pred_fallthru
          _
        // Predicated region
        $region41: #{tpu_custom_call.1} parent=15 // pred_check
          %p513 = pneg %p217
        $region42: #{tpu_custom_call.1} parent=15 // pred_check_branch
          %515 = sbr.rel (%p513) target = $region44
        $region43: #{tpu_custom_call.1} parent=15 // pred_region
          %p516 = scmp.lt.s32.totalorder %s37, 1
          %s517 = scalar_select %p516, %s37, 1
          %s518 = scalar_lea.vmem %s6, %s517
        $region44: #{tpu_custom_call.1} parent=15 // pred_fallthru
          _
        // Predicated region
        $region45: #{tpu_custom_call.1} parent=15 // pred_check
          %p519 = pneg %p243
        $region46: #{tpu_custom_call.1} parent=15 // pred_check_branch
          %521 = sbr.rel (%p519) target = $region48
        $region47: #{tpu_custom_call.1} parent=15 // pred_region
          %p522 = scmp.lt.s32.totalorder %s37, 1
          %s523 = scalar_select %p522, %s37, 1
          %s524 = scalar_lea.vmem %s7, %s523
        $region48: #{tpu_custom_call.1} parent=15 // pred_fallthru
          _
        // Predicated region
        $region49: #{tpu_custom_call.1} parent=15 // pred_check
          %p525 = pneg %p269
        $region50: #{tpu_custom_call.1} parent=15 // pred_check_branch
          %527 = sbr.rel (%p525) target = $region52
        $region51: #{tpu_custom_call.1} parent=15 // pred_region
          %p528 = scmp.lt.s32.totalorder %s37, 1
          %s529 = scalar_select %p528, %s37, 1
          %s530 = smul.addr %s529, 4
          %s531 = smul.addr %s530, 4
          %s532 = scalar_lea.vmem %s8, %s531
        $region52: #{tpu_custom_call.1} parent=15 // pred_fallthru
          _
        // Predicated region
        $region53: #{tpu_custom_call.1} parent=15 // pred_check
          %p533 = pneg %p295
        $region54: #{tpu_custom_call.1} parent=15 // pred_check_branch
          %535 = sbr.rel (%p533) target = $region56
        $region55: #{tpu_custom_call.1} parent=15 // pred_region
          %p536 = scmp.lt.s32.totalorder %s37, 1
          %s537 = scalar_select %p536, %s37, 1
          %s538 = scalar_lea.vmem %s9, %s537
        $region56: #{tpu_custom_call.1} parent=15 // pred_fallthru
          _
        // Predicated region
        $region57: #{tpu_custom_call.1} parent=15 // pred_check
          %p539 = pneg %p321
        $region58: #{tpu_custom_call.1} parent=15 // pred_check_branch
          %541 = sbr.rel (%p539) target = $region60
        $region59: #{tpu_custom_call.1} parent=15 // pred_region
          %p542 = scmp.lt.s32.totalorder %s37, 1
          %s543 = scalar_select %p542, %s37, 1
          %s544 = smul.addr %s543, 8
          %s545 = smul.addr %s544, 4
          %s546 = scalar_lea.vmem %s10, %s545
        $region60: #{tpu_custom_call.1} parent=15 // pred_fallthru
          _
        // Predicated region
        $region61: #{tpu_custom_call.1} parent=15 // pred_check
          %p547 = pneg %p347
        $region62: #{tpu_custom_call.1} parent=15 // pred_check_branch
          %549 = sbr.rel (%p547) target = $region64
        $region63: #{tpu_custom_call.1} parent=15 // pred_region
          %p550 = scmp.lt.s32.totalorder %s37, 1
          %s551 = scalar_select %p550, %s37, 1
          %s552 = scalar_lea.vmem %s11, %s551
        $region64: #{tpu_custom_call.1} parent=15 // pred_fallthru
          _
        // Predicated region
        $region65: #{tpu_custom_call.1} parent=15 // pred_check
          %p553 = pneg %p373
        $region66: #{tpu_custom_call.1} parent=15 // pred_check_branch
          %555 = sbr.rel (%p553) target = $region68
        $region67: #{tpu_custom_call.1} parent=15 // pred_region
          %p556 = scmp.lt.s32.totalorder %s37, 1
          %s557 = scalar_select %p556, %s37, 1
          %s558 = scalar_lea.vmem %s12, %s557
        $region68: #{tpu_custom_call.1} parent=15 // pred_fallthru
          _
        // Predicated region
        $region69: #{tpu_custom_call.1} parent=15 // pred_check
          %p559 = pneg %p399
        $region70: #{tpu_custom_call.1} parent=15 // pred_check_branch
          %561 = sbr.rel (%p559) target = $region72
        $region71: #{tpu_custom_call.1} parent=15 // pred_region
          %p562 = scmp.lt.s32.totalorder %s37, 1
          %s563 = scalar_select %p562, %s37, 1
          %s564 = scalar_lea.vmem %s13, %s563
        $region72: #{tpu_custom_call.1} parent=15 // pred_fallthru
          _
      $region16: #{tpu_custom_call.1} parent=5 // pred_fallthru
        _
      %p565 = scmp.le.s32.totalorder 1, %s29
      %p566 = scmp.lt.s32.totalorder %s29, 5
      %p567 = pnand %p565, %p566
      %p568 = pneg %p567
      // Predicated region
      $region73: #{tpu_custom_call.1} parent=5 // pred_check
        _
      $region74: #{tpu_custom_call.1} parent=5 // pred_check_branch
        %570 = sbr.rel (%p567) target = $region76
      $region75: #{tpu_custom_call.1} parent=5 // pred_region
        %s571 = ssub.s32 %s29, 1
        %s572 = sand.u32 %s54, 1
        %s573 = scalar_lea.sflag [#allocation3], %s572
        %s574 = sand.u32 %s54, 1
        %s575 = smul.addr %s574, 8
        %s576 = scalar_lea.vmem [#allocation2], %s575
        // Predicated region
        $region77: #{tpu_custom_call.1} parent=75 // pred_check
          %p577 = pneg %p67
        $region78: #{tpu_custom_call.1} parent=75 // pred_check_branch
          %579 = sbr.rel (%p577) target = $region80
        $region79: #{tpu_custom_call.1} parent=75 // pred_region
          %580 = dma.done %s573, 128
        $region80: #{tpu_custom_call.1} parent=75 // pred_fallthru
          _
        %s581 = sand.u32 %s80, 1
        %s582 = scalar_lea.sflag [#allocation6], %s581
        %s583 = sand.u32 %s80, 1
        %s584 = scalar_lea.vmem [#allocation5], %s583
        // Predicated region
        $region81: #{tpu_custom_call.1} parent=75 // pred_check
          %p585 = pneg %p93
        $region82: #{tpu_custom_call.1} parent=75 // pred_check_branch
          %587 = sbr.rel (%p585) target = $region84
        $region83: #{tpu_custom_call.1} parent=75 // pred_region
          %588 = dma.done %s582, 16
        $region84: #{tpu_custom_call.1} parent=75 // pred_fallthru
          _
        %s589 = sand.u32 %s54, 1
        %s590 = scalar_lea.sflag [#allocation3], %s589
        %s591 = sand.u32 %s54, 1
        %s592 = smul.addr %s591, 8
        %s593 = scalar_lea.vmem [#allocation2], %s592
        %p594 = pneg %p67
        %p595 = pneg %p64
        %s596 = sand.u32 %s80, 1
        %s597 = scalar_lea.sflag [#allocation6], %s596
        %s598 = sand.u32 %s80, 1
        %s599 = scalar_lea.vmem [#allocation5], %s598
        %p600 = pneg %p93
        %p601 = pneg %p90
        %p602 = scmp.lt.s32.totalorder %s39, 1
        %s603 = scalar_select %p602, %s39, 1
        %s604 = smul.addr %s603, 4
        %s605 = smul.addr %s604, 4
        %s606 = scalar_lea.vmem %s2, %s605
        %p607 = pneg %p119
        %p608 = pneg %p116
        %p609 = scmp.lt.s32.totalorder %s39, 1
        %s610 = scalar_select %p609, %s39, 1
        %s611 = scalar_lea.vmem %s3, %s610
        %p612 = pneg %p145
        %p613 = pneg %p142
        %p614 = scmp.lt.s32.totalorder %s39, 1
        %s615 = scalar_select %p614, %s39, 1
        %s616 = smul.addr %s615, 4
        %s617 = smul.addr %s616, 4
        %s618 = scalar_lea.vmem %s4, %s617
        %p619 = pneg %p171
        %p620 = pneg %p168
        %p621 = scmp.lt.s32.totalorder %s39, 1
        %s622 = scalar_select %p621, %s39, 1
        %s623 = scalar_lea.vmem %s5, %s622
        %p624 = pneg %p197
        %p625 = pneg %p194
        %p626 = scmp.lt.s32.totalorder %s39, 1
        %s627 = scalar_select %p626, %s39, 1
        %s628 = scalar_lea.vmem %s6, %s627
        %p629 = pneg %p223
        %p630 = pneg %p220
        %p631 = scmp.lt.s32.totalorder %s39, 1
        %s632 = scalar_select %p631, %s39, 1
        %s633 = scalar_lea.vmem %s7, %s632
        %p634 = pneg %p249
        %p635 = pneg %p246
        %p636 = scmp.lt.s32.totalorder %s39, 1
        %s637 = scalar_select %p636, %s39, 1
        %s638 = smul.addr %s637, 4
        %s639 = smul.addr %s638, 4
        %s640 = scalar_lea.vmem %s8, %s639
        %p641 = pneg %p275
        %p642 = pneg %p272
        %p643 = scmp.lt.s32.totalorder %s39, 1
        %s644 = scalar_select %p643, %s39, 1
        %s645 = scalar_lea.vmem %s9, %s644
        %p646 = pneg %p301
        %p647 = pneg %p298
        %p648 = scmp.lt.s32.totalorder %s39, 1
        %s649 = scalar_select %p648, %s39, 1
        %s650 = smul.addr %s649, 8
        %s651 = smul.addr %s650, 4
        %s652 = scalar_lea.vmem %s10, %s651
        %p653 = pneg %p327
        %p654 = pneg %p324
        %p655 = scmp.lt.s32.totalorder %s39, 1
        %s656 = scalar_select %p655, %s39, 1
        %s657 = scalar_lea.vmem %s11, %s656
        %p658 = pneg %p353
        %p659 = pneg %p350
        %p660 = scmp.lt.s32.totalorder %s39, 1
        %s661 = scalar_select %p660, %s39, 1
        %s662 = scalar_lea.vmem %s12, %s661
        %p663 = pneg %p379
        %p664 = pneg %p376
        %p665 = scmp.lt.s32.totalorder %s39, 1
        %s666 = scalar_select %p665, %s39, 1
        %s667 = scalar_lea.vmem %s13, %s666
        %p668 = pneg %p405
        %p669 = pneg %p402
        %p670 = pneg %p431
        %p671 = pneg %p428
        %s672 = sand.u32 %s418, 1
        %s673 = scalar_lea.sflag [#allocation4], %s672
        %s674 = sand.u32 %s418, 1
        %s675 = smul.addr %s674, 8
        %s676 = scalar_lea.vmem [#allocation7], %s675
        %p677 = scmp.lt.s32.totalorder %s39, 1
        %s678 = scalar_select %p677, %s39, 1
        %s679 = smul.addr %s678, 4
        %s680 = smul.addr %s679, 4
        %s681 = scalar_lea.vmem %s2, %s680
        %p682 = scmp.lt.s32.totalorder %s39, 1
        %s683 = scalar_select %p682, %s39, 1
        %s684 = scalar_lea.vmem %s3, %s683
        %p685 = scmp.lt.s32.totalorder %s39, 1
        %s686 = scalar_select %p685, %s39, 1
        %s687 = smul.addr %s686, 4
        %s688 = smul.addr %s687, 4
        %s689 = scalar_lea.vmem %s4, %s688
        %p690 = scmp.lt.s32.totalorder %s39, 1
        %s691 = scalar_select %p690, %s39, 1
        %s692 = scalar_lea.vmem %s5, %s691
        %p693 = scmp.lt.s32.totalorder %s39, 1
        %s694 = scalar_select %p693, %s39, 1
        %s695 = scalar_lea.vmem %s6, %s694
        %p696 = scmp.lt.s32.totalorder %s39, 1
        %s697 = scalar_select %p696, %s39, 1
        %s698 = scalar_lea.vmem %s7, %s697
        %p699 = scmp.lt.s32.totalorder %s39, 1
        %s700 = scalar_select %p699, %s39, 1
        %s701 = smul.addr %s700, 4
        %s702 = smul.addr %s701, 4
        %s703 = scalar_lea.vmem %s8, %s702
        %p704 = scmp.lt.s32.totalorder %s39, 1
        %s705 = scalar_select %p704, %s39, 1
        %s706 = scalar_lea.vmem %s9, %s705
        %p707 = scmp.lt.s32.totalorder %s39, 1
        %s708 = scalar_select %p707, %s39, 1
        %s709 = smul.addr %s708, 8
        %s710 = smul.addr %s709, 4
        %s711 = scalar_lea.vmem %s10, %s710
        %p712 = scmp.lt.s32.totalorder %s39, 1
        %s713 = scalar_select %p712, %s39, 1
        %s714 = scalar_lea.vmem %s11, %s713
        %p715 = scmp.lt.s32.totalorder %s39, 1
        %s716 = scalar_select %p715, %s39, 1
        %s717 = scalar_lea.vmem %s12, %s716
        %p718 = scmp.lt.s32.totalorder %s39, 1
        %s719 = scalar_select %p718, %s39, 1
        %s720 = scalar_lea.vmem %s13, %s719
        %p722 = scmp.eq.s32.totalorder %s39, 0
        // Predicated region
        $region85: #{tpu_custom_call.1} parent=75 // pred_check
          %p723 = pneg %p722
        $region86: #{tpu_custom_call.1} parent=75 // pred_check_branch
          %725 = sbr.rel (%p723) target = $region88
        $region87: #{tpu_custom_call.1} parent=75 // pred_region
          %v726 = vld [vmem:[%s576] sm:$0xff]
          %vm727 = vcmask 261120
          %728 = vst.msk [vmem:[%s676] sm:$0xff] %vm727, %v726
        $region88: #{tpu_custom_call.1} parent=75 // pred_fallthru
          _
        %v729 = vld [vmem:[%s676] sm:$0xff]
        %v730 = vpack.c.bf16 %v729, %v729
        %v731 = vld [vmem:[%s681] sm:$0xf]
        %v732 = vld [vmem:[%s681 + $0x4] sm:$0xf]
        %v733 = vld [vmem:[%s681 + $0x8] sm:$0xf]
        %v734 = vld [vmem:[%s681 + $0xc] sm:$0xf]
        %v735 = vld [vmem:[%s684] sm:$0x1]
        %v737 = vlaneseq
        %v738 = vshrl.u32 %v737, 7
        %v739 = vsub.s32 0, %v738
        %v740 = vrot.slane %v735, %v739
        %v746 = vunpack.c.l.b16 %v731
        %v747 = vunpack.c.l.b16 %v732
        %v748 = vunpack.c.l.b16 %v733
        %v749 = vunpack.c.l.b16 %v734
        %v750 = vpack.c.b16 %v747, %v746
        %v751 = vpack.c.b16 %v749, %v748
        %vm754 = vcmask 261120
        %v756 = vsel %vm754, %v730, 0
        %758 = vmatprep.subr.bf16.mxu0 0
        %759 = vmatpush1.bf16.msra.mxu0 0
        %760 = vmatprep.subr.bf16.mxu0 0
        %761 = vmatpush1.bf16.msra.mxu0 0
        %762 = vmatprep.subr.bf16.mxu0 0
        %763 = vmatpush1.bf16.msra.mxu0 0
        %764 = vmatprep.subr.bf16.mxu0 0
        %765 = vmatpush1.bf16.msra.mxu0 0
        %766 = vmatprep.subr.bf16.mxu0 0
        %767 = vmatpush1.bf16.msra.mxu0 0
        %768 = vmatprep.subr.bf16.mxu0 0
        %769 = vmatpush1.bf16.msra.mxu0 0
        %770 = vmatprep.subr.bf16.mxu0 0
        %771 = vmatpush1.bf16.msra.mxu0 %v751
        %772 = vmatprep.subr.bf16.mxu0 0
        %773 = vmatpush1.bf16.msra.mxu0 %v750
        %774 = vmatprep.subr.bf16.mxu0 0
        %775 = vmatpush2.bf16.msra.mxu0 0
        %776 = vmatprep.subr.bf16.mxu0 0
        %777 = vmatpush2.bf16.msra.mxu0 0
        %778 = vmatprep.subr.bf16.mxu0 0
        %779 = vmatpush2.bf16.msra.mxu0 0
        %780 = vmatprep.subr.bf16.mxu0 0
        %781 = vmatpush2.bf16.msra.mxu0 0
        %782 = vmatprep.subr.bf16.mxu0 0
        %783 = vmatpush2.bf16.msra.mxu0 0
        %784 = vmatprep.subr.bf16.mxu0 0
        %785 = vmatpush2.bf16.msra.mxu0 0
        %786 = vmatprep.subr.bf16.mxu0 0
        %787 = vmatpush2.bf16.msra.mxu0 0
        %788 = vmatprep.subr.bf16.mxu0 0
        %789 = vmatpush2.bf16.msra.mxu0 0
        %790 = vmatprep.mubr.bf16.mxu0 0
        %791 = vmatmul.mubr.bf16.gmra.mxu0 %v756
        %v792 = vpop.f32.mrf.mxu0
        %v793 = vadd.f32 %v740, %v792
        %v794 = vpop.f32.mrf.mxu0
        %v795 = vpop.f32.mrf.mxu0
        %v796 = vpop.f32.mrf.mxu0
        %797 = vdwg.mxu0
        %v798 = vmul.f32 %v793, 0.35355338
        %v799 = vld [vmem:[%s689] sm:$0xf]
        %v800 = vld [vmem:[%s689 + $0x4] sm:$0xf]
        %v801 = vld [vmem:[%s689 + $0x8] sm:$0xf]
        %v802 = vld [vmem:[%s689 + $0xc] sm:$0xf]
        %v803 = vld [vmem:[%s584] sm:$0x1]
        %v804 = vpack.c.bf16 %v798, %v798
        %v805 = vpack.c.bf16 %v793, %v793
        %v807 = vlaneseq
        %v808 = vshrl.u32 %v807, 7
        %v809 = vsub.s32 0, %v808
        %v810 = vrot.slane %v803, %v809
        %813 = vrot.lane.b32.xlu0 %v805, 96
        %v814 = vpop.permute.xlu0 %813
        %vm815 = vcmask 64512
        %v817 = vsel %vm815, %v804, 0
        %v820 = vsel %vm815, %v814, 0
        %822 = vmatprep.subr.bf16.mxu0 0
        %823 = vmatpush1.bf16.xpose.msra.mxu0 0
        %824 = vmatprep.subr.bf16.mxu0 0
        %825 = vmatpush1.bf16.xpose.msra.mxu0 0
        %826 = vmatprep.subr.bf16.mxu0 0
        %827 = vmatpush1.bf16.xpose.msra.mxu0 0
        %828 = vmatprep.subr.bf16.mxu0 0
        %829 = vmatpush1.bf16.xpose.msra.mxu0 0
        %830 = vmatprep.subr.bf16.mxu0 0
        %831 = vmatpush1.bf16.xpose.msra.mxu0 0
        %832 = vmatprep.subr.bf16.mxu0 0
        %833 = vmatpush1.bf16.xpose.msra.mxu0 0
        %834 = vmatprep.subr.bf16.mxu0 0
        %835 = vmatpush1.bf16.xpose.msra.mxu0 0
        %836 = vmatprep.subr.bf16.mxu0 0
        %837 = vmatpush1.bf16.xpose.msra.mxu0 %v820
        %838 = vmatprep.subr.bf16.mxu0 0
        %839 = vmatpush2.bf16.xpose.msra.mxu0 0
        %840 = vmatprep.subr.bf16.mxu0 0
        %841 = vmatpush2.bf16.xpose.msra.mxu0 0
        %842 = vmatprep.subr.bf16.mxu0 0
        %843 = vmatpush2.bf16.xpose.msra.mxu0 0
        %844 = vmatprep.subr.bf16.mxu0 0
        %845 = vmatpush2.bf16.xpose.msra.mxu0 0
        %846 = vmatprep.subr.bf16.mxu0 0
        %847 = vmatpush2.bf16.xpose.msra.mxu0 0
        %848 = vmatprep.subr.bf16.mxu0 0
        %849 = vmatpush2.bf16.xpose.msra.mxu0 0
        %850 = vmatprep.subr.bf16.mxu0 0
        %851 = vmatpush2.bf16.xpose.msra.mxu0 0
        %852 = vmatprep.subr.bf16.mxu0 0
        %853 = vmatpush2.bf16.xpose.msra.mxu0 0
        %854 = vmatprep.mubr.bf16.mxu0 0
        %855 = vmatmul.mubr.bf16.gmra.mxu0 %v817
        %v856 = vpop.f32.mrf.mxu0
        %v857 = vadd.f32 %v810, %v856
        %v858 = vpop.f32.mrf.mxu0
        %v859 = vpop.f32.mrf.mxu0
        %v860 = vpop.f32.mrf.mxu0
        %861 = vdwg.mxu0
        %v862 = vsel %vm815, %v857, -inf
        %863 = vmax.xlane.f32.xlu0 %v862
        %v864 = vpop.xlane.xlu0 %863
        %v865 = vsub.f32 %v857, %v864
        %v866 = vmul.f32 %v865, 1.442695
        %v867 = vpow.pop %v866
        %v868 = vsel %vm815, %v867, 0.0
        %869 = vadd.xlane.f32.xlu0 %v868
        %v870 = vpop.xlane.xlu0 %869
        %v871 = vrcp.pop %v870
        %v872 = vmul.f32 %v867, %v871
        %v873 = vpack.c.bf16 %v872, %v872
        %874 = vrot.lane.b32.xlu0 %v805, 64
        %v875 = vpop.permute.xlu0 %874
        %v877 = vsel %vm815, %v873, 0
        %vm879 = vcmask 1043456
        %v881 = vsel %vm879, %v875, 0
        %883 = vmatprep.subr.bf16.mxu0 0
        %884 = vmatpush1.bf16.msra.mxu0 0
        %885 = vmatprep.subr.bf16.mxu0 0
        %886 = vmatpush1.bf16.msra.mxu0 0
        %887 = vmatprep.subr.bf16.mxu0 0
        %888 = vmatpush1.bf16.msra.mxu0 0
        %889 = vmatprep.subr.bf16.mxu0 0
        %890 = vmatpush1.bf16.msra.mxu0 0
        %891 = vmatprep.subr.bf16.mxu0 0
        %892 = vmatpush1.bf16.msra.mxu0 0
        %893 = vmatprep.subr.bf16.mxu0 0
        %894 = vmatpush1.bf16.msra.mxu0 0
        %895 = vmatprep.subr.bf16.mxu0 0
        %896 = vmatpush1.bf16.msra.mxu0 0
        %897 = vmatprep.subr.bf16.mxu0 0
        %898 = vmatpush1.bf16.msra.mxu0 %v881
        %899 = vmatprep.subr.bf16.mxu0 0
        %900 = vmatpush2.bf16.msra.mxu0 0
        %901 = vmatprep.subr.bf16.mxu0 0
        %902 = vmatpush2.bf16.msra.mxu0 0
        %903 = vmatprep.subr.bf16.mxu0 0
        %904 = vmatpush2.bf16.msra.mxu0 0
        %905 = vmatprep.subr.bf16.mxu0 0
        %906 = vmatpush2.bf16.msra.mxu0 0
        %907 = vmatprep.subr.bf16.mxu0 0
        %908 = vmatpush2.bf16.msra.mxu0 0
        %909 = vmatprep.subr.bf16.mxu0 0
        %910 = vmatpush2.bf16.msra.mxu0 0
        %911 = vmatprep.subr.bf16.mxu0 0
        %912 = vmatpush2.bf16.msra.mxu0 0
        %913 = vmatprep.subr.bf16.mxu0 0
        %914 = vmatpush2.bf16.msra.mxu0 0
        %915 = vmatprep.mubr.bf16.mxu0 0
        %916 = vmatmul.mubr.bf16.gmra.mxu0 %v877
        %v917 = vpop.f32.mrf.mxu0
        %v918 = vadd.f32 0.0, %v917
        %v919 = vpop.f32.mrf.mxu0
        %v920 = vpop.f32.mrf.mxu0
        %v921 = vpop.f32.mrf.mxu0
        %922 = vdwg.mxu0
        %v923 = vpack.c.bf16 %v918, %v918
        %925 = vrot.lane.b32.xlu0 %v804, 120
        %v926 = vpop.permute.xlu0 %925
        %927 = vrot.lane.b32.xlu0 %v805, 88
        %v928 = vpop.permute.xlu0 %927
        %v930 = vsel %vm815, %v926, 0
        %v933 = vsel %vm815, %v928, 0
        %935 = vmatprep.subr.bf16.mxu0 0
        %936 = vmatpush1.bf16.xpose.msra.mxu0 0
        %937 = vmatprep.subr.bf16.mxu0 0
        %938 = vmatpush1.bf16.xpose.msra.mxu0 0
        %939 = vmatprep.subr.bf16.mxu0 0
        %940 = vmatpush1.bf16.xpose.msra.mxu0 0
        %941 = vmatprep.subr.bf16.mxu0 0
        %942 = vmatpush1.bf16.xpose.msra.mxu0 0
        %943 = vmatprep.subr.bf16.mxu0 0
        %944 = vmatpush1.bf16.xpose.msra.mxu0 0
        %945 = vmatprep.subr.bf16.mxu0 0
        %946 = vmatpush1.bf16.xpose.msra.mxu0 0
        %947 = vmatprep.subr.bf16.mxu0 0
        %948 = vmatpush1.bf16.xpose.msra.mxu0 0
        %949 = vmatprep.subr.bf16.mxu0 0
        %950 = vmatpush1.bf16.xpose.msra.mxu0 %v933
        %951 = vmatprep.subr.bf16.mxu0 0
        %952 = vmatpush2.bf16.xpose.msra.mxu0 0
        %953 = vmatprep.subr.bf16.mxu0 0
        %954 = vmatpush2.bf16.xpose.msra.mxu0 0
        %955 = vmatprep.subr.bf16.mxu0 0
        %956 = vmatpush2.bf16.xpose.msra.mxu0 0
        %957 = vmatprep.subr.bf16.mxu0 0
        %958 = vmatpush2.bf16.xpose.msra.mxu0 0
        %959 = vmatprep.subr.bf16.mxu0 0
        %960 = vmatpush2.bf16.xpose.msra.mxu0 0
        %961 = vmatprep.subr.bf16.mxu0 0
        %962 = vmatpush2.bf16.xpose.msra.mxu0 0
        %963 = vmatprep.subr.bf16.mxu0 0
        %964 = vmatpush2.bf16.xpose.msra.mxu0 0
        %965 = vmatprep.subr.bf16.mxu0 0
        %966 = vmatpush2.bf16.xpose.msra.mxu0 0
        %967 = vmatprep.mubr.bf16.mxu0 0
        %968 = vmatmul.mubr.bf16.gmra.mxu0 %v930
        %v969 = vpop.f32.mrf.mxu0
        %v970 = vadd.f32 %v810, %v969
        %v971 = vpop.f32.mrf.mxu0
        %v972 = vpop.f32.mrf.mxu0
        %v973 = vpop.f32.mrf.mxu0
        %974 = vdwg.mxu0
        %v975 = vsel %vm815, %v970, -inf
        %976 = vmax.xlane.f32.xlu0 %v975
        %v977 = vpop.xlane.xlu0 %976
        %v978 = vsub.f32 %v970, %v977
        %v979 = vmul.f32 %v978, 1.442695
        %v980 = vpow.pop %v979
        %v981 = vsel %vm815, %v980, 0.0
        %982 = vadd.xlane.f32.xlu0 %v981
        %v983 = vpop.xlane.xlu0 %982
        %v984 = vrcp.pop %v983
        %v985 = vmul.f32 %v980, %v984
        %v986 = vpack.c.bf16 %v985, %v985
        %987 = vrot.lane.b32.xlu0 %v805, 56
        %v988 = vpop.permute.xlu0 %987
        %v990 = vsel %vm815, %v986, 0
        %v993 = vsel %vm879, %v988, 0
        %995 = vmatprep.subr.bf16.mxu0 0
        %996 = vmatpush1.bf16.msra.mxu0 0
        %997 = vmatprep.subr.bf16.mxu0 0
        %998 = vmatpush1.bf16.msra.mxu0 0
        %999 = vmatprep.subr.bf16.mxu0 0
        %1000 = vmatpush1.bf16.msra.mxu0 0
        %1001 = vmatprep.subr.bf16.mxu0 0
        %1002 = vmatpush1.bf16.msra.mxu0 0
        %1003 = vmatprep.subr.bf16.mxu0 0
        %1004 = vmatpush1.bf16.msra.mxu0 0
        %1005 = vmatprep.subr.bf16.mxu0 0
        %1006 = vmatpush1.bf16.msra.mxu0 0
        %1007 = vmatprep.subr.bf16.mxu0 0
        %1008 = vmatpush1.bf16.msra.mxu0 0
        %1009 = vmatprep.subr.bf16.mxu0 0
        %1010 = vmatpush1.bf16.msra.mxu0 %v993
        %1011 = vmatprep.subr.bf16.mxu0 0
        %1012 = vmatpush2.bf16.msra.mxu0 0
        %1013 = vmatprep.subr.bf16.mxu0 0
        %1014 = vmatpush2.bf16.msra.mxu0 0
        %1015 = vmatprep.subr.bf16.mxu0 0
        %1016 = vmatpush2.bf16.msra.mxu0 0
        %1017 = vmatprep.subr.bf16.mxu0 0
        %1018 = vmatpush2.bf16.msra.mxu0 0
        %1019 = vmatprep.subr.bf16.mxu0 0
        %1020 = vmatpush2.bf16.msra.mxu0 0
        %1021 = vmatprep.subr.bf16.mxu0 0
        %1022 = vmatpush2.bf16.msra.mxu0 0
        %1023 = vmatprep.subr.bf16.mxu0 0
        %1024 = vmatpush2.bf16.msra.mxu0 0
        %1025 = vmatprep.subr.bf16.mxu0 0
        %1026 = vmatpush2.bf16.msra.mxu0 0
        %1027 = vmatprep.mubr.bf16.mxu0 0
        %1028 = vmatmul.mubr.bf16.gmra.mxu0 %v990
        %v1029 = vpop.f32.mrf.mxu0
        %v1030 = vadd.f32 0.0, %v1029
        %v1031 = vpop.f32.mrf.mxu0
        %v1032 = vpop.f32.mrf.mxu0
        %v1033 = vpop.f32.mrf.mxu0
        %1034 = vdwg.mxu0
        %v1035 = vpack.c.bf16 %v1030, %v1030
        %v1037 = vsel %vm815, %v1035, 0
        %v1040 = vsel %vm879, %v800, 0
        %1042 = vmatprep.subr.bf16.mxu0 0
        %1043 = vmatpush1.bf16.msra.mxu0 0
        %1044 = vmatprep.subr.bf16.mxu0 0
        %1045 = vmatpush1.bf16.msra.mxu0 0
        %1046 = vmatprep.subr.bf16.mxu0 0
        %1047 = vmatpush1.bf16.msra.mxu0 0
        %1048 = vmatprep.subr.bf16.mxu0 0
        %1049 = vmatpush1.bf16.msra.mxu0 0
        %1050 = vmatprep.subr.bf16.mxu0 0
        %1051 = vmatpush1.bf16.msra.mxu0 0
        %1052 = vmatprep.subr.bf16.mxu0 0
        %1053 = vmatpush1.bf16.msra.mxu0 0
        %1054 = vmatprep.subr.bf16.mxu0 0
        %1055 = vmatpush1.bf16.msra.mxu0 0
        %1056 = vmatprep.subr.bf16.mxu0 0
        %1057 = vmatpush1.bf16.msra.mxu0 %v1040
        %1058 = vmatprep.subr.bf16.mxu0 0
        %1059 = vmatpush2.bf16.msra.mxu0 0
        %1060 = vmatprep.subr.bf16.mxu0 0
        %1061 = vmatpush2.bf16.msra.mxu0 0
        %1062 = vmatprep.subr.bf16.mxu0 0
        %1063 = vmatpush2.bf16.msra.mxu0 0
        %1064 = vmatprep.subr.bf16.mxu0 0
        %1065 = vmatpush2.bf16.msra.mxu0 0
        %1066 = vmatprep.subr.bf16.mxu0 0
        %1067 = vmatpush2.bf16.msra.mxu0 0
        %1068 = vmatprep.subr.bf16.mxu0 0
        %1069 = vmatpush2.bf16.msra.mxu0 0
        %1070 = vmatprep.subr.bf16.mxu0 0
        %1071 = vmatpush2.bf16.msra.mxu0 0
        %1072 = vmatprep.subr.bf16.mxu0 0
        %1073 = vmatpush2.bf16.msra.mxu0 0
        %1074 = vmatprep.mubr.bf16.mxu0 0
        %1075 = vmatmul.mubr.bf16.gmra.mxu0 %v1037
        %v1076 = vpop.f32.mrf.mxu0
        %v1077 = vadd.f32 0.0, %v1076
        %v1078 = vpop.f32.mrf.mxu0
        %v1079 = vpop.f32.mrf.mxu0
        %v1080 = vpop.f32.mrf.mxu0
        %1081 = vdwg.mxu0
        %v1083 = vsel %vm815, %v923, 0
        %v1086 = vsel %vm879, %v799, 0
        %1088 = vmatprep.subr.bf16.mxu0 0
        %1089 = vmatpush1.bf16.msra.mxu0 0
        %1090 = vmatprep.subr.bf16.mxu0 0
        %1091 = vmatpush1.bf16.msra.mxu0 0
        %1092 = vmatprep.subr.bf16.mxu0 0
        %1093 = vmatpush1.bf16.msra.mxu0 0
        %1094 = vmatprep.subr.bf16.mxu0 0
        %1095 = vmatpush1.bf16.msra.mxu0 0
        %1096 = vmatprep.subr.bf16.mxu0 0
        %1097 = vmatpush1.bf16.msra.mxu0 0
        %1098 = vmatprep.subr.bf16.mxu0 0
        %1099 = vmatpush1.bf16.msra.mxu0 0
        %1100 = vmatprep.subr.bf16.mxu0 0
        %1101 = vmatpush1.bf16.msra.mxu0 0
        %1102 = vmatprep.subr.bf16.mxu0 0
        %1103 = vmatpush1.bf16.msra.mxu0 %v1086
        %1104 = vmatprep.subr.bf16.mxu0 0
        %1105 = vmatpush2.bf16.msra.mxu0 0
        %1106 = vmatprep.subr.bf16.mxu0 0
        %1107 = vmatpush2.bf16.msra.mxu0 0
        %1108 = vmatprep.subr.bf16.mxu0 0
        %1109 = vmatpush2.bf16.msra.mxu0 0
        %1110 = vmatprep.subr.bf16.mxu0 0
        %1111 = vmatpush2.bf16.msra.mxu0 0
        %1112 = vmatprep.subr.bf16.mxu0 0
        %1113 = vmatpush2.bf16.msra.mxu0 0
        %1114 = vmatprep.subr.bf16.mxu0 0
        %1115 = vmatpush2.bf16.msra.mxu0 0
        %1116 = vmatprep.subr.bf16.mxu0 0
        %1117 = vmatpush2.bf16.msra.mxu0 0
        %1118 = vmatprep.subr.bf16.mxu0 0
        %1119 = vmatpush2.bf16.msra.mxu0 0
        %1120 = vmatprep.mubr.bf16.mxu0 0
        %1121 = vmatmul.mubr.bf16.gmra.mxu0 %v1083
        %v1122 = vpop.f32.mrf.mxu0
        %v1123 = vadd.f32 %v1077, %v1122
        %v1124 = vpop.f32.mrf.mxu0
        %v1125 = vpop.f32.mrf.mxu0
        %v1126 = vpop.f32.mrf.mxu0
        %1127 = vdwg.mxu0
        %1128 = vrot.lane.b32.xlu0 %v804, 112
        %v1129 = vpop.permute.xlu0 %1128
        %1130 = vrot.lane.b32.xlu0 %v805, 80
        %v1131 = vpop.permute.xlu0 %1130
        %v1133 = vsel %vm815, %v1129, 0
        %v1136 = vsel %vm815, %v1131, 0
        %1138 = vmatprep.subr.bf16.mxu0 0
        %1139 = vmatpush1.bf16.xpose.msra.mxu0 0
        %1140 = vmatprep.subr.bf16.mxu0 0
        %1141 = vmatpush1.bf16.xpose.msra.mxu0 0
        %1142 = vmatprep.subr.bf16.mxu0 0
        %1143 = vmatpush1.bf16.xpose.msra.mxu0 0
        %1144 = vmatprep.subr.bf16.mxu0 0
        %1145 = vmatpush1.bf16.xpose.msra.mxu0 0
        %1146 = vmatprep.subr.bf16.mxu0 0
        %1147 = vmatpush1.bf16.xpose.msra.mxu0 0
        %1148 = vmatprep.subr.bf16.mxu0 0
        %1149 = vmatpush1.bf16.xpose.msra.mxu0 0
        %1150 = vmatprep.subr.bf16.mxu0 0
        %1151 = vmatpush1.bf16.xpose.msra.mxu0 0
        %1152 = vmatprep.subr.bf16.mxu0 0
        %1153 = vmatpush1.bf16.xpose.msra.mxu0 %v1136
        %1154 = vmatprep.subr.bf16.mxu0 0
        %1155 = vmatpush2.bf16.xpose.msra.mxu0 0
        %1156 = vmatprep.subr.bf16.mxu0 0
        %1157 = vmatpush2.bf16.xpose.msra.mxu0 0
        %1158 = vmatprep.subr.bf16.mxu0 0
        %1159 = vmatpush2.bf16.xpose.msra.mxu0 0
        %1160 = vmatprep.subr.bf16.mxu0 0
        %1161 = vmatpush2.bf16.xpose.msra.mxu0 0
        %1162 = vmatprep.subr.bf16.mxu0 0
        %1163 = vmatpush2.bf16.xpose.msra.mxu0 0
        %1164 = vmatprep.subr.bf16.mxu0 0
        %1165 = vmatpush2.bf16.xpose.msra.mxu0 0
        %1166 = vmatprep.subr.bf16.mxu0 0
        %1167 = vmatpush2.bf16.xpose.msra.mxu0 0
        %1168 = vmatprep.subr.bf16.mxu0 0
        %1169 = vmatpush2.bf16.xpose.msra.mxu0 0
        %1170 = vmatprep.mubr.bf16.mxu0 0
        %1171 = vmatmul.mubr.bf16.gmra.mxu0 %v1133
        %v1172 = vpop.f32.mrf.mxu0
        %v1173 = vadd.f32 %v810, %v1172
        %v1174 = vpop.f32.mrf.mxu0
        %v1175 = vpop.f32.mrf.mxu0
        %v1176 = vpop.f32.mrf.mxu0
        %1177 = vdwg.mxu0
        %v1178 = vsel %vm815, %v1173, -inf
        %1179 = vmax.xlane.f32.xlu0 %v1178
        %v1180 = vpop.xlane.xlu0 %1179
        %v1181 = vsub.f32 %v1173, %v1180
        %v1182 = vmul.f32 %v1181, 1.442695
        %v1183 = vpow.pop %v1182
        %v1184 = vsel %vm815, %v1183, 0.0
        %1185 = vadd.xlane.f32.xlu0 %v1184
        %v1186 = vpop.xlane.xlu0 %1185
        %v1187 = vrcp.pop %v1186
        %v1188 = vmul.f32 %v1183, %v1187
        %v1189 = vpack.c.bf16 %v1188, %v1188
        %1190 = vrot.lane.b32.xlu0 %v805, 48
        %v1191 = vpop.permute.xlu0 %1190
        %v1193 = vsel %vm815, %v1189, 0
        %v1196 = vsel %vm879, %v1191, 0
        %1198 = vmatprep.subr.bf16.mxu0 0
        %1199 = vmatpush1.bf16.msra.mxu0 0
        %1200 = vmatprep.subr.bf16.mxu0 0
        %1201 = vmatpush1.bf16.msra.mxu0 0
        %1202 = vmatprep.subr.bf16.mxu0 0
        %1203 = vmatpush1.bf16.msra.mxu0 0
        %1204 = vmatprep.subr.bf16.mxu0 0
        %1205 = vmatpush1.bf16.msra.mxu0 0
        %1206 = vmatprep.subr.bf16.mxu0 0
        %1207 = vmatpush1.bf16.msra.mxu0 0
        %1208 = vmatprep.subr.bf16.mxu0 0
        %1209 = vmatpush1.bf16.msra.mxu0 0
        %1210 = vmatprep.subr.bf16.mxu0 0
        %1211 = vmatpush1.bf16.msra.mxu0 0
        %1212 = vmatprep.subr.bf16.mxu0 0
        %1213 = vmatpush1.bf16.msra.mxu0 %v1196
        %1214 = vmatprep.subr.bf16.mxu0 0
        %1215 = vmatpush2.bf16.msra.mxu0 0
        %1216 = vmatprep.subr.bf16.mxu0 0
        %1217 = vmatpush2.bf16.msra.mxu0 0
        %1218 = vmatprep.subr.bf16.mxu0 0
        %1219 = vmatpush2.bf16.msra.mxu0 0
        %1220 = vmatprep.subr.bf16.mxu0 0
        %1221 = vmatpush2.bf16.msra.mxu0 0
        %1222 = vmatprep.subr.bf16.mxu0 0
        %1223 = vmatpush2.bf16.msra.mxu0 0
        %1224 = vmatprep.subr.bf16.mxu0 0
        %1225 = vmatpush2.bf16.msra.mxu0 0
        %1226 = vmatprep.subr.bf16.mxu0 0
        %1227 = vmatpush2.bf16.msra.mxu0 0
        %1228 = vmatprep.subr.bf16.mxu0 0
        %1229 = vmatpush2.bf16.msra.mxu0 0
        %1230 = vmatprep.mubr.bf16.mxu0 0
        %1231 = vmatmul.mubr.bf16.gmra.mxu0 %v1193
        %v1232 = vpop.f32.mrf.mxu0
        %v1233 = vadd.f32 0.0, %v1232
        %v1234 = vpop.f32.mrf.mxu0
        %v1235 = vpop.f32.mrf.mxu0
        %v1236 = vpop.f32.mrf.mxu0
        %1237 = vdwg.mxu0
        %v1238 = vpack.c.bf16 %v1233, %v1233
        %v1240 = vsel %vm815, %v1238, 0
        %v1243 = vsel %vm879, %v801, 0
        %1245 = vmatprep.subr.bf16.mxu0 0
        %1246 = vmatpush1.bf16.msra.mxu0 0
        %1247 = vmatprep.subr.bf16.mxu0 0
        %1248 = vmatpush1.bf16.msra.mxu0 0
        %1249 = vmatprep.subr.bf16.mxu0 0
        %1250 = vmatpush1.bf16.msra.mxu0 0
        %1251 = vmatprep.subr.bf16.mxu0 0
        %1252 = vmatpush1.bf16.msra.mxu0 0
        %1253 = vmatprep.subr.bf16.mxu0 0
        %1254 = vmatpush1.bf16.msra.mxu0 0
        %1255 = vmatprep.subr.bf16.mxu0 0
        %1256 = vmatpush1.bf16.msra.mxu0 0
        %1257 = vmatprep.subr.bf16.mxu0 0
        %1258 = vmatpush1.bf16.msra.mxu0 0
        %1259 = vmatprep.subr.bf16.mxu0 0
        %1260 = vmatpush1.bf16.msra.mxu0 %v1243
        %1261 = vmatprep.subr.bf16.mxu0 0
        %1262 = vmatpush2.bf16.msra.mxu0 0
        %1263 = vmatprep.subr.bf16.mxu0 0
        %1264 = vmatpush2.bf16.msra.mxu0 0
        %1265 = vmatprep.subr.bf16.mxu0 0
        %1266 = vmatpush2.bf16.msra.mxu0 0
        %1267 = vmatprep.subr.bf16.mxu0 0
        %1268 = vmatpush2.bf16.msra.mxu0 0
        %1269 = vmatprep.subr.bf16.mxu0 0
        %1270 = vmatpush2.bf16.msra.mxu0 0
        %1271 = vmatprep.subr.bf16.mxu0 0
        %1272 = vmatpush2.bf16.msra.mxu0 0
        %1273 = vmatprep.subr.bf16.mxu0 0
        %1274 = vmatpush2.bf16.msra.mxu0 0
        %1275 = vmatprep.subr.bf16.mxu0 0
        %1276 = vmatpush2.bf16.msra.mxu0 0
        %1277 = vmatprep.mubr.bf16.mxu0 0
        %1278 = vmatmul.mubr.bf16.gmra.mxu0 %v1240
        %v1279 = vpop.f32.mrf.mxu0
        %v1280 = vadd.f32 0.0, %v1279
        %v1281 = vpop.f32.mrf.mxu0
        %v1282 = vpop.f32.mrf.mxu0
        %v1283 = vpop.f32.mrf.mxu0
        %1284 = vdwg.mxu0
        %v1285 = vadd.f32 %v1123, %v1280
        %1286 = vrot.lane.b32.xlu0 %v804, 104
        %v1287 = vpop.permute.xlu0 %1286
        %1288 = vrot.lane.b32.xlu0 %v805, 72
        %v1289 = vpop.permute.xlu0 %1288
        %v1291 = vsel %vm815, %v1287, 0
        %v1294 = vsel %vm815, %v1289, 0
        %1296 = vmatprep.subr.bf16.mxu0 0
        %1297 = vmatpush1.bf16.xpose.msra.mxu0 0
        %1298 = vmatprep.subr.bf16.mxu0 0
        %1299 = vmatpush1.bf16.xpose.msra.mxu0 0
        %1300 = vmatprep.subr.bf16.mxu0 0
        %1301 = vmatpush1.bf16.xpose.msra.mxu0 0
        %1302 = vmatprep.subr.bf16.mxu0 0
        %1303 = vmatpush1.bf16.xpose.msra.mxu0 0
        %1304 = vmatprep.subr.bf16.mxu0 0
        %1305 = vmatpush1.bf16.xpose.msra.mxu0 0
        %1306 = vmatprep.subr.bf16.mxu0 0
        %1307 = vmatpush1.bf16.xpose.msra.mxu0 0
        %1308 = vmatprep.subr.bf16.mxu0 0
        %1309 = vmatpush1.bf16.xpose.msra.mxu0 0
        %1310 = vmatprep.subr.bf16.mxu0 0
        %1311 = vmatpush1.bf16.xpose.msra.mxu0 %v1294
        %1312 = vmatprep.subr.bf16.mxu0 0
        %1313 = vmatpush2.bf16.xpose.msra.mxu0 0
        %1314 = vmatprep.subr.bf16.mxu0 0
        %1315 = vmatpush2.bf16.xpose.msra.mxu0 0
        %1316 = vmatprep.subr.bf16.mxu0 0
        %1317 = vmatpush2.bf16.xpose.msra.mxu0 0
        %1318 = vmatprep.subr.bf16.mxu0 0
        %1319 = vmatpush2.bf16.xpose.msra.mxu0 0
        %1320 = vmatprep.subr.bf16.mxu0 0
        %1321 = vmatpush2.bf16.xpose.msra.mxu0 0
        %1322 = vmatprep.subr.bf16.mxu0 0
        %1323 = vmatpush2.bf16.xpose.msra.mxu0 0
        %1324 = vmatprep.subr.bf16.mxu0 0
        %1325 = vmatpush2.bf16.xpose.msra.mxu0 0
        %1326 = vmatprep.subr.bf16.mxu0 0
        %1327 = vmatpush2.bf16.xpose.msra.mxu0 0
        %1328 = vmatprep.mubr.bf16.mxu0 0
        %1329 = vmatmul.mubr.bf16.gmra.mxu0 %v1291
        %v1330 = vpop.f32.mrf.mxu0
        %v1331 = vadd.f32 %v810, %v1330
        %v1332 = vpop.f32.mrf.mxu0
        %v1333 = vpop.f32.mrf.mxu0
        %v1334 = vpop.f32.mrf.mxu0
        %1335 = vdwg.mxu0
        %v1336 = vsel %vm815, %v1331, -inf
        %1337 = vmax.xlane.f32.xlu0 %v1336
        %v1338 = vpop.xlane.xlu0 %1337
        %v1339 = vsub.f32 %v1331, %v1338
        %v1340 = vmul.f32 %v1339, 1.442695
        %v1341 = vpow.pop %v1340
        %v1342 = vsel %vm815, %v1341, 0.0
        %1343 = vadd.xlane.f32.xlu0 %v1342
        %v1344 = vpop.xlane.xlu0 %1343
        %v1345 = vrcp.pop %v1344
        %v1346 = vmul.f32 %v1341, %v1345
        %v1347 = vpack.c.bf16 %v1346, %v1346
        %1348 = vrot.lane.b32.xlu0 %v805, 40
        %v1349 = vpop.permute.xlu0 %1348
        %v1351 = vsel %vm815, %v1347, 0
        %v1354 = vsel %vm879, %v1349, 0
        %1356 = vmatprep.subr.bf16.mxu0 0
        %1357 = vmatpush1.bf16.msra.mxu0 0
        %1358 = vmatprep.subr.bf16.mxu0 0
        %1359 = vmatpush1.bf16.msra.mxu0 0
        %1360 = vmatprep.subr.bf16.mxu0 0
        %1361 = vmatpush1.bf16.msra.mxu0 0
        %1362 = vmatprep.subr.bf16.mxu0 0
        %1363 = vmatpush1.bf16.msra.mxu0 0
        %1364 = vmatprep.subr.bf16.mxu0 0
        %1365 = vmatpush1.bf16.msra.mxu0 0
        %1366 = vmatprep.subr.bf16.mxu0 0
        %1367 = vmatpush1.bf16.msra.mxu0 0
        %1368 = vmatprep.subr.bf16.mxu0 0
        %1369 = vmatpush1.bf16.msra.mxu0 0
        %1370 = vmatprep.subr.bf16.mxu0 0
        %1371 = vmatpush1.bf16.msra.mxu0 %v1354
        %1372 = vmatprep.subr.bf16.mxu0 0
        %1373 = vmatpush2.bf16.msra.mxu0 0
        %1374 = vmatprep.subr.bf16.mxu0 0
        %1375 = vmatpush2.bf16.msra.mxu0 0
        %1376 = vmatprep.subr.bf16.mxu0 0
        %1377 = vmatpush2.bf16.msra.mxu0 0
        %1378 = vmatprep.subr.bf16.mxu0 0
        %1379 = vmatpush2.bf16.msra.mxu0 0
        %1380 = vmatprep.subr.bf16.mxu0 0
        %1381 = vmatpush2.bf16.msra.mxu0 0
        %1382 = vmatprep.subr.bf16.mxu0 0
        %1383 = vmatpush2.bf16.msra.mxu0 0
        %1384 = vmatprep.subr.bf16.mxu0 0
        %1385 = vmatpush2.bf16.msra.mxu0 0
        %1386 = vmatprep.subr.bf16.mxu0 0
        %1387 = vmatpush2.bf16.msra.mxu0 0
        %1388 = vmatprep.mubr.bf16.mxu0 0
        %1389 = vmatmul.mubr.bf16.gmra.mxu0 %v1351
        %v1390 = vpop.f32.mrf.mxu0
        %v1391 = vadd.f32 0.0, %v1390
        %v1392 = vpop.f32.mrf.mxu0
        %v1393 = vpop.f32.mrf.mxu0
        %v1394 = vpop.f32.mrf.mxu0
        %1395 = vdwg.mxu0
        %v1396 = vpack.c.bf16 %v1391, %v1391
        %v1398 = vsel %vm815, %v1396, 0
        %v1401 = vsel %vm879, %v802, 0
        %1403 = vmatprep.subr.bf16.mxu0 0
        %1404 = vmatpush1.bf16.msra.mxu0 0
        %1405 = vmatprep.subr.bf16.mxu0 0
        %1406 = vmatpush1.bf16.msra.mxu0 0
        %1407 = vmatprep.subr.bf16.mxu0 0
        %1408 = vmatpush1.bf16.msra.mxu0 0
        %1409 = vmatprep.subr.bf16.mxu0 0
        %1410 = vmatpush1.bf16.msra.mxu0 0
        %1411 = vmatprep.subr.bf16.mxu0 0
        %1412 = vmatpush1.bf16.msra.mxu0 0
        %1413 = vmatprep.subr.bf16.mxu0 0
        %1414 = vmatpush1.bf16.msra.mxu0 0
        %1415 = vmatprep.subr.bf16.mxu0 0
        %1416 = vmatpush1.bf16.msra.mxu0 0
        %1417 = vmatprep.subr.bf16.mxu0 0
        %1418 = vmatpush1.bf16.msra.mxu0 %v1401
        %1419 = vmatprep.subr.bf16.mxu0 0
        %1420 = vmatpush2.bf16.msra.mxu0 0
        %1421 = vmatprep.subr.bf16.mxu0 0
        %1422 = vmatpush2.bf16.msra.mxu0 0
        %1423 = vmatprep.subr.bf16.mxu0 0
        %1424 = vmatpush2.bf16.msra.mxu0 0
        %1425 = vmatprep.subr.bf16.mxu0 0
        %1426 = vmatpush2.bf16.msra.mxu0 0
        %1427 = vmatprep.subr.bf16.mxu0 0
        %1428 = vmatpush2.bf16.msra.mxu0 0
        %1429 = vmatprep.subr.bf16.mxu0 0
        %1430 = vmatpush2.bf16.msra.mxu0 0
        %1431 = vmatprep.subr.bf16.mxu0 0
        %1432 = vmatpush2.bf16.msra.mxu0 0
        %1433 = vmatprep.subr.bf16.mxu0 0
        %1434 = vmatpush2.bf16.msra.mxu0 0
        %1435 = vmatprep.mubr.bf16.mxu0 0
        %1436 = vmatmul.mubr.bf16.gmra.mxu0 %v1398
        %v1437 = vpop.f32.mrf.mxu0
        %v1438 = vadd.f32 0.0, %v1437
        %v1439 = vpop.f32.mrf.mxu0
        %v1440 = vpop.f32.mrf.mxu0
        %v1441 = vpop.f32.mrf.mxu0
        %1442 = vdwg.mxu0
        %v1443 = vadd.f32 %v1285, %v1438
        %v1444 = vld [vmem:[%s692] sm:$0x1]
        %v1446 = vlaneseq
        %v1447 = vshrl.u32 %v1446, 7
        %v1448 = vsub.s32 0, %v1447
        %v1449 = vrot.slane %v1444, %v1448
        %v1451 = vadd.f32 %v1443, %v1449
        %v1452 = vld [vmem:[%s695] sm:$0x1]
        %v1453 = vld [vmem:[%s698] sm:$0x1]
        %v1454 = vadd.f32 %v729, %v1451
        %v1455 = vsel %vm754, %v1454, 0.0
        %1456 = vadd.xlane.f32.xlu0 %v1455
        %v1457 = vpop.xlane.xlu0 %1456
        %v1458 = vrcp.pop 32.0
        %v1459 = vmul.f32 %v1457, %v1458
        %v1460 = vsub.f32 %v1454, %v1459
        %v1461 = vmul.f32 %v1460, %v1460
        %v1462 = vsel %vm754, %v1461, 0.0
        %1463 = vadd.xlane.f32.xlu0 %v1462
        %v1464 = vpop.xlane.xlu0 %1463
        %v1465 = vmul.f32 %v1464, %v1458
        %v1466 = vadd.f32 %v1465, 1e-05
        %v1467 = vrsqrt.pop %v1466
        %v1468 = vmul.f32 %v1460, %v1467
        %v1470 = vlaneseq
        %v1471 = vshrl.u32 %v1470, 7
        %v1472 = vsub.s32 0, %v1471
        %v1473 = vrot.slane %v1452, %v1472
        %v1475 = vmul.f32 %v1468, %v1473
        %v1477 = vlaneseq
        %v1478 = vshrl.u32 %v1477, 7
        %v1479 = vsub.s32 0, %v1478
        %v1480 = vrot.slane %v1453, %v1479
        %v1482 = vadd.f32 %v1475, %v1480
        %v1483 = vpack.c.bf16 %v1482, %v1482
        %v1484 = vld [vmem:[%s703] sm:$0xf]
        %v1485 = vld [vmem:[%s703 + $0x4] sm:$0xf]
        %v1486 = vld [vmem:[%s703 + $0x8] sm:$0xf]
        %v1487 = vld [vmem:[%s703 + $0xc] sm:$0xf]
        %v1488 = vld [vmem:[%s706] sm:$0x1]
        %v1490 = vlaneseq
        %v1491 = vshrl.u32 %v1490, 7
        %v1492 = vsub.s32 0, %v1491
        %v1493 = vrot.slane %v1488, %v1492
        %v1499 = vunpack.c.l.b16 %v1484
        %v1500 = vunpack.c.l.b16 %v1485
        %v1501 = vunpack.c.l.b16 %v1486
        %v1502 = vunpack.c.l.b16 %v1487
        %v1503 = vpack.c.b16 %v1500, %v1499
        %v1504 = vpack.c.b16 %v1502, %v1501
        %v1508 = vsel %vm754, %v1483, 0
        %1510 = vmatprep.subr.bf16.mxu0 0
        %1511 = vmatpush1.bf16.msra.mxu0 0
        %1512 = vmatprep.subr.bf16.mxu0 0
        %1513 = vmatpush1.bf16.msra.mxu0 0
        %1514 = vmatprep.subr.bf16.mxu0 0
        %1515 = vmatpush1.bf16.msra.mxu0 0
        %1516 = vmatprep.subr.bf16.mxu0 0
        %1517 = vmatpush1.bf16.msra.mxu0 0
        %1518 = vmatprep.subr.bf16.mxu0 0
        %1519 = vmatpush1.bf16.msra.mxu0 0
        %1520 = vmatprep.subr.bf16.mxu0 0
        %1521 = vmatpush1.bf16.msra.mxu0 0
        %1522 = vmatprep.subr.bf16.mxu0 0
        %1523 = vmatpush1.bf16.msra.mxu0 %v1504
        %1524 = vmatprep.subr.bf16.mxu0 0
        %1525 = vmatpush1.bf16.msra.mxu0 %v1503
        %1526 = vmatprep.subr.bf16.mxu0 0
        %1527 = vmatpush2.bf16.msra.mxu0 0
        %1528 = vmatprep.subr.bf16.mxu0 0
        %1529 = vmatpush2.bf16.msra.mxu0 0
        %1530 = vmatprep.subr.bf16.mxu0 0
        %1531 = vmatpush2.bf16.msra.mxu0 0
        %1532 = vmatprep.subr.bf16.mxu0 0
        %1533 = vmatpush2.bf16.msra.mxu0 0
        %1534 = vmatprep.subr.bf16.mxu0 0
        %1535 = vmatpush2.bf16.msra.mxu0 0
        %1536 = vmatprep.subr.bf16.mxu0 0
        %1537 = vmatpush2.bf16.msra.mxu0 0
        %1538 = vmatprep.subr.bf16.mxu0 0
        %1539 = vmatpush2.bf16.msra.mxu0 0
        %1540 = vmatprep.subr.bf16.mxu0 0
        %1541 = vmatpush2.bf16.msra.mxu0 0
        %1542 = vmatprep.mubr.bf16.mxu0 0
        %1543 = vmatmul.mubr.bf16.gmra.mxu0 %v1508
        %v1544 = vpop.f32.mrf.mxu0
        %v1545 = vadd.f32 %v1493, %v1544
        %v1546 = vpop.f32.mrf.mxu0
        %v1547 = vpop.f32.mrf.mxu0
        %v1548 = vpop.f32.mrf.mxu0
        %1549 = vdwg.mxu0
        %v1550 = vmax.f32 %v1545, 0.0
        %v1551 = vpack.c.bf16 %v1550, %v1550
        %v1552 = vld [vmem:[%s711] sm:$0xf]
        %v1553 = vld [vmem:[%s711 + $0x4] sm:$0xf]
        %v1554 = vld [vmem:[%s711 + $0x8] sm:$0xf]
        %v1555 = vld [vmem:[%s711 + $0xc] sm:$0xf]
        %v1556 = vld [vmem:[%s711 + $0x10] sm:$0xf]
        %v1557 = vld [vmem:[%s711 + $0x14] sm:$0xf]
        %v1558 = vld [vmem:[%s711 + $0x18] sm:$0xf]
        %v1559 = vld [vmem:[%s711 + $0x1c] sm:$0xf]
        %v1560 = vld [vmem:[%s714] sm:$0x1]
        %v1562 = vlaneseq
        %v1563 = vshrl.u32 %v1562, 7
        %v1564 = vsub.s32 0, %v1563
        %v1565 = vrot.slane %v1560, %v1564
        %v1575 = vunpack.c.l.b16 %v1552
        %v1576 = vunpack.c.l.b16 %v1553
        %v1577 = vunpack.c.l.b16 %v1554
        %v1578 = vunpack.c.l.b16 %v1555
        %v1579 = vunpack.c.l.b16 %v1556
        %v1580 = vunpack.c.l.b16 %v1557
        %v1581 = vunpack.c.l.b16 %v1558
        %v1582 = vunpack.c.l.b16 %v1559
        %v1583 = vpack.c.b16 %v1576, %v1575
        %v1584 = vpack.c.b16 %v1578, %v1577
        %v1585 = vpack.c.b16 %v1580, %v1579
        %v1586 = vpack.c.b16 %v1582, %v1581
        %vm1591 = vcmask 523264
        %v1593 = vsel %vm1591, %v1551, 0
        %1595 = vmatprep.subr.bf16.mxu0 0
        %1596 = vmatpush1.bf16.msra.mxu0 0
        %1597 = vmatprep.subr.bf16.mxu0 0
        %1598 = vmatpush1.bf16.msra.mxu0 0
        %1599 = vmatprep.subr.bf16.mxu0 0
        %1600 = vmatpush1.bf16.msra.mxu0 0
        %1601 = vmatprep.subr.bf16.mxu0 0
        %1602 = vmatpush1.bf16.msra.mxu0 0
        %1603 = vmatprep.subr.bf16.mxu0 0
        %1604 = vmatpush1.bf16.msra.mxu0 %v1586
        %1605 = vmatprep.subr.bf16.mxu0 0
        %1606 = vmatpush1.bf16.msra.mxu0 %v1585
        %1607 = vmatprep.subr.bf16.mxu0 0
        %1608 = vmatpush1.bf16.msra.mxu0 %v1584
        %1609 = vmatprep.subr.bf16.mxu0 0
        %1610 = vmatpush1.bf16.msra.mxu0 %v1583
        %1611 = vmatprep.subr.bf16.mxu0 0
        %1612 = vmatpush2.bf16.msra.mxu0 0
        %1613 = vmatprep.subr.bf16.mxu0 0
        %1614 = vmatpush2.bf16.msra.mxu0 0
        %1615 = vmatprep.subr.bf16.mxu0 0
        %1616 = vmatpush2.bf16.msra.mxu0 0
        %1617 = vmatprep.subr.bf16.mxu0 0
        %1618 = vmatpush2.bf16.msra.mxu0 0
        %1619 = vmatprep.subr.bf16.mxu0 0
        %1620 = vmatpush2.bf16.msra.mxu0 0
        %1621 = vmatprep.subr.bf16.mxu0 0
        %1622 = vmatpush2.bf16.msra.mxu0 0
        %1623 = vmatprep.subr.bf16.mxu0 0
        %1624 = vmatpush2.bf16.msra.mxu0 0
        %1625 = vmatprep.subr.bf16.mxu0 0
        %1626 = vmatpush2.bf16.msra.mxu0 0
        %1627 = vmatprep.mubr.bf16.mxu0 0
        %1628 = vmatmul.mubr.bf16.gmra.mxu0 %v1593
        %v1629 = vpop.f32.mrf.mxu0
        %v1630 = vadd.f32 %v1565, %v1629
        %v1631 = vpop.f32.mrf.mxu0
        %v1632 = vpop.f32.mrf.mxu0
        %v1633 = vpop.f32.mrf.mxu0
        %1634 = vdwg.mxu0
        %v1635 = vld [vmem:[%s717] sm:$0x1]
        %v1636 = vld [vmem:[%s720] sm:$0x1]
        %v1637 = vadd.f32 %v1482, %v1630
        %v1638 = vsel %vm754, %v1637, 0.0
        %1639 = vadd.xlane.f32.xlu0 %v1638
        %v1640 = vpop.xlane.xlu0 %1639
        %v1641 = vmul.f32 %v1640, %v1458
        %v1642 = vsub.f32 %v1637, %v1641
        %v1643 = vmul.f32 %v1642, %v1642
        %v1644 = vsel %vm754, %v1643, 0.0
        %1645 = vadd.xlane.f32.xlu0 %v1644
        %v1646 = vpop.xlane.xlu0 %1645
        %v1647 = vmul.f32 %v1646, %v1458
        %v1648 = vadd.f32 %v1647, 1e-05
        %v1649 = vrsqrt.pop %v1648
        %v1650 = vmul.f32 %v1642, %v1649
        %v1652 = vlaneseq
        %v1653 = vshrl.u32 %v1652, 7
        %v1654 = vsub.s32 0, %v1653
        %v1655 = vrot.slane %v1635, %v1654
        %v1657 = vmul.f32 %v1650, %v1655
        %v1659 = vlaneseq
        %v1660 = vshrl.u32 %v1659, 7
        %v1661 = vsub.s32 0, %v1660
        %v1662 = vrot.slane %v1636, %v1661
        %v1664 = vadd.f32 %v1657, %v1662
        %1665 = vst.msk [vmem:[%s676] sm:$0xff] %vm754, %v1664
        %s1666 = sand.u32 %s418, 1
        %s1667 = scalar_lea.sflag [#allocation4], %s1666
        %s1668 = sand.u32 %s418, 1
        %s1669 = smul.addr %s1668, 8
        %s1670 = scalar_lea.vmem [#allocation7], %s1669
        // Predicated region
        $region89: #{tpu_custom_call.1} parent=75 // pred_check
          %p1671 = pneg %p428
        $region90: #{tpu_custom_call.1} parent=75 // pred_check_branch
          %1673 = sbr.rel (%p1671) target = $region92
        $region91: #{tpu_custom_call.1} parent=75 // pred_region
          %s1675 = ssub.s32 128, 128
          %1676 = vsyncadd %s1667, %s1675
          %s1677 = smul.addr %s38, 128
          %s1678 = scalar_lea.hbm %s14, %s1677
          %s1680 = sshll.u32 %s1670, 4
          %s1681 = int_to_ptr.vmem [resolvable:$true] %s1680
          %1683 = dma.vmem_to_hbm [thread:$0]  %s1681, 128, %s1678, %s1667
        $region92: #{tpu_custom_call.1} parent=75 // pred_fallthru
          _
      $region76: #{tpu_custom_call.1} parent=5 // pred_fallthru
        _
      %p1684 = scmp.le.s32.totalorder 2, %s29
      // Predicated region
      $region93: #{tpu_custom_call.1} parent=5 // pred_check
        %p1685 = pneg %p1684
      $region94: #{tpu_custom_call.1} parent=5 // pred_check_branch
        %1687 = sbr.rel (%p1685) target = $region96
      $region95: #{tpu_custom_call.1} parent=5 // pred_region
        %s1688 = ssub.s32 %s29, 2
        // Predicated region
        $region97: #{tpu_custom_call.1} parent=95 // pred_check
          %p1689 = pneg %p434
        $region98: #{tpu_custom_call.1} parent=95 // pred_check_branch
          %1691 = sbr.rel (%p1689) target = $region100
        $region99: #{tpu_custom_call.1} parent=95 // pred_region
          %s1692 = sand.u32 %s419, 1
          %s1693 = scalar_lea.sflag [#allocation4], %s1692
          %s1694 = sand.u32 %s419, 1
          %s1695 = smul.addr %s1694, 8
          %s1696 = scalar_lea.vmem [#allocation7], %s1695
          %1697 = dma.done %s1693, 128
        $region100: #{tpu_custom_call.1} parent=95 // pred_fallthru
          _
      $region96: #{tpu_custom_call.1} parent=5 // pred_fallthru
        _
    $region6: #{tpu_custom_call.1} parent=1 // loop_footer
      %s33 = sadd.s32 1, %s29
    $region7: #{tpu_custom_call.1} parent=1 // loop_footer_branch
      %28 = sbr.rel target = $region3
    $region8: #{tpu_custom_call.1} parent=1 // loop_exit
      _
    %1698 = vsyncpa [#allocation3], 1
    %s1699 = scalar_lea.sflag [#allocation3], 1
    %1700 = vsyncpa %s1699, 1
    %1701 = vsyncpa [#allocation6], 1
    %s1702 = scalar_lea.sflag [#allocation6], 1
    %1703 = vsyncpa %s1702, 1
    %1704 = vsyncpa [#allocation4], 1
    %s1705 = scalar_lea.sflag [#allocation4], 1
    %1706 = vsyncpa %s1705, 1

</llo_original>
